<compile_context>
chip_gen: v7x
topology: tpu7x:2x2x1
jax: 0.10.0
libtpu: 0.0.40
codegen_flags: <defaults>
</compile_context>

<pallas_src>
import functools
import math

import numpy as np

import jax
import jax.numpy as jnp
from jax import lax
from jax.experimental import pallas as pl
from jax.experimental.pallas import tpu as pltpu


# ----------------------------------------------------------------------------
# Fused kernel: all BSARecBlocks, whole batch, one pallas_call.
# Grid axis 0 = layer index (sequential / "arbitrary").
# ----------------------------------------------------------------------------
def bsarec_fused_kernel(
    x_ref, mask_ref, lp_ref,
    beta2_ref, ln1_g_ref, ln1_b_ref,
    wqkv_ref, bqkv_ref, wo_ref, bo_ref, ln2_g_ref, ln2_b_ref,
    w1_ref, b1_ref, w2_ref, b2_ref, ln3_g_ref, ln3_b_ref,
    out_ref,
    *, batch, seq_len, num_heads, head_size, alpha,
):
    BS, H = out_ref.shape
    B, S = batch, seq_len
    nh, d = num_heads, head_size

    # Layer 0: seed the VMEM-resident carry (out_ref) with the encoder input.
    @pl.when(pl.program_id(0) == 0)
    def _():
        out_ref[...] = x_ref[...]

    x_flat = out_ref[...]                       # (BS, H) f32, previous-layer act
    x_bf = x_flat.astype(jnp.bfloat16)
    x3 = x_flat.reshape(B, S, H)                # 3-D view only where needed

    def layer_norm(v, g_ref, b_ref):
        # BSARec LayerNorm: mean / biased var over last dim, eps = 1e-12.
        u = jnp.mean(v, axis=-1, keepdims=True)
        dv = v - u
        var = jnp.mean(dv * dv, axis=-1, keepdims=True)
        return dv * lax.rsqrt(var + 1e-12) * g_ref[...] + b_ref[...]

    # ---------------- FrequencyLayer (dsp) ----------------
    # rfft -> zero high freqs -> irfft (norm='ortho') is linear along the
    # sequence axis; lp_ref holds the exact real (S,S) projection.  f32 math.
    lp_b = jnp.broadcast_to(lp_ref[...][None], (B, S, S))
    low_pass = jnp.einsum("bst,bth->bsh", lp_b, x3,
                          preferred_element_type=jnp.float32).reshape(BS, H)
    high_pass = x_flat - low_pass
    seq_fft = low_pass + beta2_ref[...] * high_pass       # beta2 = sqrt_beta**2
    dsp = layer_norm(seq_fft + x_flat, ln1_g_ref, ln1_b_ref)

    # ---------------- MultiHeadAttention (gsp) ----------------
    # Fused QKV projection: one (BS,H)@(H,3H) matmul.  The 1/sqrt(d) score
    # scale is already folded into the Q columns of wqkv/bqkv.
    qkv = jnp.dot(x_bf, wqkv_ref[...],
                  preferred_element_type=jnp.float32) + bqkv_ref[...]
    qkv_bf = qkv.astype(jnp.bfloat16)
    mask = mask_ref[...]                        # (B, S, S) additive (0 / -1e4)

    ctx_parts = []
    for n in range(nh):                         # tiny static head loop (S x S block)
        q_h = qkv_bf[:, n * d:(n + 1) * d].reshape(B, S, d)
        k_h = qkv_bf[:, H + n * d:H + (n + 1) * d].reshape(B, S, d)
        v_h = qkv_bf[:, 2 * H + n * d:2 * H + (n + 1) * d].reshape(B, S, d)
        scores = jnp.einsum("bqd,bkd->bqk", q_h, k_h,
                            preferred_element_type=jnp.float32) + mask
        m = jnp.max(scores, axis=-1, keepdims=True)
        e = jnp.exp(scores - m)
        probs = (e / jnp.sum(e, axis=-1, keepdims=True)).astype(jnp.bfloat16)
        ctx_parts.append(
            jnp.einsum("bqk,bkd->bqd", probs, v_h,
                       preferred_element_type=jnp.float32).reshape(BS, d))

    ctx = ctx_parts[0] if nh == 1 else jnp.concatenate(ctx_parts, axis=-1)
    # Single output projection over the full (BS, H) context.
    attn_out = jnp.dot(ctx.astype(jnp.bfloat16), wo_ref[...],
                       preferred_element_type=jnp.float32) + bo_ref[...]
    gsp = layer_norm(attn_out + x_flat, ln2_g_ref, ln2_b_ref)

    # ---------------- alpha mix ----------------
    h = alpha * dsp + (1.0 - alpha) * gsp

    # ---------------- FeedForward ----------------
    inter = jnp.dot(h.astype(jnp.bfloat16), w1_ref[...],
                    preferred_element_type=jnp.float32) + b1_ref[...]
    # exact erf-based GELU (matches BSARec's gelu)
    inter = 0.5 * inter * (1.0 + lax.erf(inter * (1.0 / math.sqrt(2.0))))
    ff = jnp.dot(inter.astype(jnp.bfloat16), w2_ref[...],
                 preferred_element_type=jnp.float32) + b2_ref[...]

    # Carry write; HBM writeback happens once after the last layer because the
    # output block index is constant across the (only) grid axis.
    out_ref[...] = layer_norm(ff + h, ln3_g_ref, ln3_b_ref)


# ----------------------------------------------------------------------------
# Wrappers
# ----------------------------------------------------------------------------
PARAM_ORDER = ("beta2", "ln1_g", "ln1_b",
               "wqkv", "bqkv", "wo", "bo", "ln2_g", "ln2_b",
               "w1", "b1", "w2", "b2", "ln3_g", "ln3_b")

_BF16_PARAMS = frozenset({"wqkv", "wo", "w1", "w2"})


def _const_spec(shape):
    nd = len(shape)
    return pl.BlockSpec(tuple(shape), lambda l, _nd=nd: (0,) * _nd)


def _layer_spec(shape):
    rest = tuple(shape[1:])
    nd = len(rest)
    return pl.BlockSpec((None,) + rest, lambda l, _nd=nd: (l,) + (0,) * _nd)


def stack_layer_params(layer_params, num_heads):
    """Stack per-layer params with a leading layer dim.

    Fuses wq|wk|wv -> (H, 3H), bq|bk|bv -> (1, 3H), folds the 1/sqrt(head_size)
    score scale into the Q columns, squares sqrt_beta, and casts weights to
    bf16 (biases / LN params stay f32)."""
    H = layer_params[0]["wq"].shape[0]
    scale = 1.0 / math.sqrt(H // num_heads)
    per_layer = []
    for p in layer_params:
        per_layer.append({
            "beta2": p["sqrt_beta"] ** 2,
            "ln1_g": p["ln1_g"], "ln1_b": p["ln1_b"],
            "wqkv": jnp.concatenate([p["wq"] * scale, p["wk"], p["wv"]], axis=-1),
            "bqkv": jnp.concatenate([p["bq"] * scale, p["bk"], p["bv"]], axis=-1),
            "wo": p["wo"], "bo": p["bo"],
            "ln2_g": p["ln2_g"], "ln2_b": p["ln2_b"],
            "w1": p["w1"], "b1": p["b1"],
            "w2": p["w2"], "b2": p["b2"],
            "ln3_g": p["ln3_g"], "ln3_b": p["ln3_b"],
        })
    P = {}
    for name in PARAM_ORDER:
        arr = jnp.stack([e[name] for e in per_layer])
        P[name] = arr.astype(jnp.bfloat16 if name in _BF16_PARAMS else jnp.float32)
    return P


def bsarec_fused_forward(x_flat, mask3, lp, P, *, batch, seq_len, num_heads, alpha):
    BS, H = x_flat.shape
    L = P["wqkv"].shape[0]
    head_size = H // num_heads

    args = [x_flat, mask3, lp] + [P[name] for name in PARAM_ORDER]
    in_specs = [_const_spec(x_flat.shape), _const_spec(mask3.shape),
                _const_spec(lp.shape)]
    in_specs += [_layer_spec(P[name].shape) for name in PARAM_ORDER]

    kernel = functools.partial(
        bsarec_fused_kernel, batch=batch, seq_len=seq_len,
        num_heads=num_heads, head_size=head_size, alpha=alpha)

    return pl.pallas_call(
        kernel,
        out_shape=jax.ShapeDtypeStruct((BS, H), jnp.float32),
        grid=(L,),
        in_specs=in_specs,
        out_specs=pl.BlockSpec((BS, H), lambda l: (0, 0)),
        compiler_params=pltpu.CompilerParams(
            dimension_semantics=("arbitrary",),
            vmem_limit_bytes=32 * 1024 * 1024),
    )(*args)


def bsarec_encoder(x, attn_mask, lp, layer_params, *, num_heads, alpha,
                   output_all_encoded_layers=False):
    B, S, H = x.shape
    mask3 = jnp.reshape(attn_mask, (B, S, S)).astype(jnp.float32)
    lp32 = lp.astype(jnp.float32)
    P = stack_layer_params(layer_params, num_heads)
    x_flat = x.reshape(B * S, H).astype(jnp.float32)

    if not output_all_encoded_layers:
        h = bsarec_fused_forward(x_flat, mask3, lp32, P, batch=B, seq_len=S,
                                 num_heads=num_heads, alpha=alpha)
        return [x, h.reshape(B, S, H)]

    # Intermediate layers requested: run the fused kernel one layer at a time.
    outs = [x]
    h = x_flat
    for i in range(P["wqkv"].shape[0]):
        Pi = {k: v[i:i + 1] for k, v in P.items()}
        h = bsarec_fused_forward(h, mask3, lp32, Pi, batch=B, seq_len=S,
                                 num_heads=num_heads, alpha=alpha)
        outs.append(h.reshape(B, S, H))
    return outs


# ----------------------------------------------------------------------------
# Deterministic parameter init + FFT low-pass projection matrix (host-side)
# ----------------------------------------------------------------------------
def make_lowpass_matrix(seq_len, c_keep):
    """Real (S,S) matrix equivalent to: irfft(zero_high(rfft(x, ortho)), ortho)."""
    eye = np.eye(seq_len, dtype=np.float64)
    freq = np.fft.rfft(eye, axis=0, norm="ortho")               # (S//2+1, S)
    keep = (np.arange(seq_len // 2 + 1) < c_keep)[:, None]
    lp = np.fft.irfft(freq * keep, n=seq_len, axis=0, norm="ortho")
    return jnp.asarray(lp, dtype=jnp.float32)


def init_block_params(key, hidden):
    H = hidden
    ks = jax.random.split(key, 8)
    n = lambda k, shape: (0.02 * jax.random.normal(k, shape, jnp.float32))
    ones = lambda shape: jnp.ones(shape, jnp.float32)
    zeros = lambda shape: jnp.zeros(shape, jnp.float32)
    return {
        "sqrt_beta": jax.random.normal(ks[0], (1, H), jnp.float32),  # (1,1,H) squeezed
        "ln1_g": ones((1, H)), "ln1_b": zeros((1, H)),
        "wq": n(ks[1], (H, H)), "bq": zeros((1, H)),
        "wk": n(ks[2], (H, H)), "bk": zeros((1, H)),
        "wv": n(ks[3], (H, H)), "bv": zeros((1, H)),
        "wo": n(ks[4], (H, H)), "bo": zeros((1, H)),
        "ln2_g": ones((1, H)), "ln2_b": zeros((1, H)),
        "w1": n(ks[5], (H, 4 * H)), "b1": zeros((1, 4 * H)),
        "w2": n(ks[6], (4 * H, H)), "b2": zeros((1, H)),
        "ln3_g": ones((1, H)), "ln3_b": zeros((1, H)),
    }


# ----------------------------------------------------------------------------
if __name__ == "__main__":
    # args: hidden_size=32, num_attention_heads=2, num_hidden_layers=2, c=5, alpha=0.7
    B, S, H = 2, 8, 32
    num_heads = 2
    num_layers = 2
    c_arg = 5
    alpha = 0.7

    key = jax.random.PRNGKey(0)
    k_x, k_p = jax.random.split(key)

    hidden_states = jax.random.normal(k_x, (B, S, H), jnp.float32)

    # SASRec-style additive extended attention mask: 0 keep, -10000 masked (causal)
    causal = jnp.tril(jnp.ones((S, S), jnp.float32))
    attn_mask = jnp.broadcast_to((1.0 - causal) * -10000.0, (B, 1, S, S))

    lp = make_lowpass_matrix(S, c_arg // 2 + 1)   # self.c = args.c // 2 + 1
    layer_params = [init_block_params(k, H) for k in jax.random.split(k_p, num_layers)]

    outputs = bsarec_encoder(
        hidden_states, attn_mask, lp, layer_params,
        num_heads=num_heads, alpha=alpha, output_all_encoded_layers=False,
    )
    jax.block_until_ready(outputs[-1])
    print("KERNEL_OK")
</pallas_src>

<mosaic_0001>
module attributes {stable_mosaic.version = 11 : i64} {
  func.func @bsarec_fused_kernel(%arg0: i32, %arg1: memref<16x32xf32, #tpu.memory_space<vmem>>, %arg2: memref<2x8x8xf32, #tpu.memory_space<vmem>>, %arg3: memref<8x8xf32, #tpu.memory_space<vmem>>, %arg4: memref<1x1x32xf32, #tpu.memory_space<vmem>>, %arg5: memref<1x1x32xf32, #tpu.memory_space<vmem>>, %arg6: memref<1x1x32xf32, #tpu.memory_space<vmem>>, %arg7: memref<1x32x96xbf16, #tpu.memory_space<vmem>>, %arg8: memref<1x1x96xf32, #tpu.memory_space<vmem>>, %arg9: memref<1x32x32xbf16, #tpu.memory_space<vmem>>, %arg10: memref<1x1x32xf32, #tpu.memory_space<vmem>>, %arg11: memref<1x1x32xf32, #tpu.memory_space<vmem>>, %arg12: memref<1x1x32xf32, #tpu.memory_space<vmem>>, %arg13: memref<1x32x128xbf16, #tpu.memory_space<vmem>>, %arg14: memref<1x1x128xf32, #tpu.memory_space<vmem>>, %arg15: memref<1x128x32xbf16, #tpu.memory_space<vmem>>, %arg16: memref<1x1x32xf32, #tpu.memory_space<vmem>>, %arg17: memref<1x1x32xf32, #tpu.memory_space<vmem>>, %arg18: memref<1x1x32xf32, #tpu.memory_space<vmem>>, %arg19: memref<16x32xf32, #tpu.memory_space<vmem>>) attributes {dimension_semantics = [#tpu.dimension_semantics<arbitrary>], iteration_bounds = array<i64: 2>, scalar_prefetch = 0 : i64, scratch_operands = 0 : i64, tpu.core_type = #tpu.core_type<tc>, window_params = [{pipeline_mode = #tpu.pipeline_mode<synchronous>, transform_indices = @transform_0, window_bounds = array<i64: 16, 32>}, {pipeline_mode = #tpu.pipeline_mode<synchronous>, transform_indices = @transform_1, window_bounds = array<i64: 2, 8, 8>}, {pipeline_mode = #tpu.pipeline_mode<synchronous>, transform_indices = @transform_2, window_bounds = array<i64: 8, 8>}, {transform_indices = @transform_3, window_bounds = array<i64: 1, 1, 32>}, {transform_indices = @transform_4, window_bounds = array<i64: 1, 1, 32>}, {transform_indices = @transform_5, window_bounds = array<i64: 1, 1, 32>}, {transform_indices = @transform_6, window_bounds = array<i64: 1, 32, 96>}, {transform_indices = @transform_7, window_bounds = array<i64: 1, 1, 96>}, {transform_indices = @transform_8, window_bounds = array<i64: 1, 32, 32>}, {transform_indices = @transform_9, window_bounds = array<i64: 1, 1, 32>}, {transform_indices = @transform_10, window_bounds = array<i64: 1, 1, 32>}, {transform_indices = @transform_11, window_bounds = array<i64: 1, 1, 32>}, {transform_indices = @transform_12, window_bounds = array<i64: 1, 32, 128>}, {transform_indices = @transform_13, window_bounds = array<i64: 1, 1, 128>}, {transform_indices = @transform_14, window_bounds = array<i64: 1, 128, 32>}, {transform_indices = @transform_15, window_bounds = array<i64: 1, 1, 32>}, {transform_indices = @transform_16, window_bounds = array<i64: 1, 1, 32>}, {transform_indices = @transform_17, window_bounds = array<i64: 1, 1, 32>}, {pipeline_mode = #tpu.pipeline_mode<synchronous>, transform_indices = @transform_18, window_bounds = array<i64: 16, 32>}]} {
    %c0_i32 = arith.constant 0 : i32
    %0 = arith.cmpi eq, %arg0, %c0_i32 : i32
    %1 = arith.extui %0 : i1 to i32
    %c0_i32_0 = arith.constant 0 : i32
    %2 = arith.cmpi ne, %1, %c0_i32_0 : i32
    scf.if %2 {
      %c0_86 = arith.constant 0 : index
      %c0_87 = arith.constant 0 : index
      %181 = vector.load %arg1[%c0_86, %c0_87] : memref<16x32xf32, #tpu.memory_space<vmem>>, vector<16x32xf32>
      %c0_88 = arith.constant 0 : index
      %c0_89 = arith.constant 0 : index
      %182 = vector.load %arg19[%c0_88, %c0_89] : memref<16x32xf32, #tpu.memory_space<vmem>>, vector<16x32xf32>
      tpu.vector_store %arg19[%c0_88, %c0_89], %181 {strides = array<i32>} : memref<16x32xf32, #tpu.memory_space<vmem>>, vector<16x32xf32>,
    } else {
    }
    %c0 = arith.constant 0 : index
    %c0_1 = arith.constant 0 : index
    %3 = vector.load %arg19[%c0, %c0_1] : memref<16x32xf32, #tpu.memory_space<vmem>>, vector<16x32xf32>
    %4 = arith.truncf %3 : vector<16x32xf32> to vector<16x32xbf16>
    %5 = vector.shape_cast %3 : vector<16x32xf32> to vector<2x8x32xf32>
    %c0_2 = arith.constant 0 : index
    %c0_3 = arith.constant 0 : index
    %6 = vector.load %arg3[%c0_2, %c0_3] : memref<8x8xf32, #tpu.memory_space<vmem>>, vector<8x8xf32>
    %7 = vector.shape_cast %6 : vector<8x8xf32> to vector<1x8x8xf32>
    %8 = vector.shape_cast %7 : vector<1x8x8xf32> to vector<1x8x8xf32>
    %9 = vector.broadcast %8 : vector<1x8x8xf32> to vector<2x8x8xf32>
    "tpu.trace_start"() <{level = 10 : i32, message = "bst,bth->bsh"}> : () -> ()
    %cst = arith.constant dense<0.000000e+00> : vector<2x8x32xf32>
    %10 = tpu.matmul %9, %5, %cst {dimension_numbers = #tpu.dot_dimension_numbers<[2], [1], [1], [2], [0, 0, 0, 1, 1, 2], [0], [0]>} : vector<2x8x8xf32>, vector<2x8x32xf32>, vector<2x8x32xf32> -> vector<2x8x32xf32>
    "tpu.trace_stop"() : () -> ()
    %11 = vector.shape_cast %10 : vector<2x8x32xf32> to vector<16x32xf32>
    %12 = arith.subf %3, %11 : vector<16x32xf32>
    %c0_4 = arith.constant 0 : index
    %c0_5 = arith.constant 0 : index
    %c0_6 = arith.constant 0 : index
    %13 = vector.load %arg4[%c0_4, %c0_5, %c0_6] : memref<1x1x32xf32, #tpu.memory_space<vmem>>, vector<1x1x32xf32>
    %14 = vector.shape_cast %13 : vector<1x1x32xf32> to vector<1x32xf32>
    %15 = vector.broadcast %14 : vector<1x32xf32> to vector<16x32xf32>
    %16 = arith.mulf %15, %12 : vector<16x32xf32>
    %17 = arith.addf %11, %16 : vector<16x32xf32>
    %18 = arith.addf %17, %3 : vector<16x32xf32>
    %cst_7 = arith.constant dense<0.000000e+00> : vector<16xf32>
    %19 = vector.multi_reduction <add>, %18, %cst_7 [1] : vector<16x32xf32> to vector<16xf32>
    %20 = vector.shape_cast %19 : vector<16xf32> to vector<16x1xf32>
    %cst_8 = arith.constant 3.200000e+01 : f32
    %21 = vector.broadcast %cst_8 : f32 to vector<16x1xf32>
    %22 = arith.divf %20, %21 : vector<16x1xf32>
    %23 = vector.broadcast %22 : vector<16x1xf32> to vector<16x32xf32>
    %24 = arith.subf %18, %23 : vector<16x32xf32>
    %25 = arith.mulf %24, %24 : vector<16x32xf32>
    %cst_9 = arith.constant dense<0.000000e+00> : vector<16xf32>
    %26 = vector.multi_reduction <add>, %25, %cst_9 [1] : vector<16x32xf32> to vector<16xf32>
    %27 = vector.shape_cast %26 : vector<16xf32> to vector<16x1xf32>
    %cst_10 = arith.constant 3.200000e+01 : f32
    %28 = vector.broadcast %cst_10 : f32 to vector<16x1xf32>
    %29 = arith.divf %27, %28 : vector<16x1xf32>
    %cst_11 = arith.constant 9.99999996E-13 : f32
    %30 = vector.broadcast %cst_11 : f32 to vector<16x1xf32>
    %31 = arith.addf %29, %30 : vector<16x1xf32>
    %32 = math.rsqrt %31 : vector<16x1xf32>
    %33 = vector.broadcast %32 : vector<16x1xf32> to vector<16x32xf32>
    %34 = arith.mulf %24, %33 : vector<16x32xf32>
    %c0_12 = arith.constant 0 : index
    %c0_13 = arith.constant 0 : index
    %c0_14 = arith.constant 0 : index
    %35 = vector.load %arg5[%c0_12, %c0_13, %c0_14] : memref<1x1x32xf32, #tpu.memory_space<vmem>>, vector<1x1x32xf32>
    %36 = vector.shape_cast %35 : vector<1x1x32xf32> to vector<1x32xf32>
    %37 = vector.broadcast %36 : vector<1x32xf32> to vector<16x32xf32>
    %38 = arith.mulf %34, %37 : vector<16x32xf32>
    %c0_15 = arith.constant 0 : index
    %c0_16 = arith.constant 0 : index
    %c0_17 = arith.constant 0 : index
    %39 = vector.load %arg6[%c0_15, %c0_16, %c0_17] : memref<1x1x32xf32, #tpu.memory_space<vmem>>, vector<1x1x32xf32>
    %40 = vector.shape_cast %39 : vector<1x1x32xf32> to vector<1x32xf32>
    %41 = vector.broadcast %40 : vector<1x32xf32> to vector<16x32xf32>
    %42 = arith.addf %38, %41 : vector<16x32xf32>
    %c0_18 = arith.constant 0 : index
    %c0_19 = arith.constant 0 : index
    %c0_20 = arith.constant 0 : index
    %43 = vector.load %arg7[%c0_18, %c0_19, %c0_20] : memref<1x32x96xbf16, #tpu.memory_space<vmem>>, vector<1x32x96xbf16>
    %44 = vector.shape_cast %43 : vector<1x32x96xbf16> to vector<32x96xbf16>
    %cst_21 = arith.constant dense<0.000000e+00> : vector<16x96xf32>
    %45 = tpu.matmul %4, %44, %cst_21 {dimension_numbers = #tpu.dot_dimension_numbers<[1], [0], [0], [1], [0, 0, 1, 1], [], []>} : vector<16x32xbf16>, vector<32x96xbf16>, vector<16x96xf32> -> vector<16x96xf32>
    %c0_22 = arith.constant 0 : index
    %c0_23 = arith.constant 0 : index
    %c0_24 = arith.constant 0 : index
    %46 = vector.load %arg8[%c0_22, %c0_23, %c0_24] : memref<1x1x96xf32, #tpu.memory_space<vmem>>, vector<1x1x96xf32>
    %47 = vector.shape_cast %46 : vector<1x1x96xf32> to vector<1x96xf32>
    %48 = vector.broadcast %47 : vector<1x96xf32> to vector<16x96xf32>
    %49 = arith.addf %45, %48 : vector<16x96xf32>
    %50 = arith.truncf %49 : vector<16x96xf32> to vector<16x96xbf16>
    %c0_25 = arith.constant 0 : index
    %c0_26 = arith.constant 0 : index
    %c0_27 = arith.constant 0 : index
    %51 = vector.load %arg2[%c0_25, %c0_26, %c0_27] : memref<2x8x8xf32, #tpu.memory_space<vmem>>, vector<2x8x8xf32>
    %52 = vector.extract_strided_slice %50 {offsets = [0, 0], sizes = [16, 16], strides = [1, 1]} : vector<16x96xbf16> to vector<16x16xbf16>
    %53 = vector.shape_cast %52 : vector<16x16xbf16> to vector<2x8x16xbf16>
    %54 = vector.extract_strided_slice %50 {offsets = [0, 32], sizes = [16, 16], strides = [1, 1]} : vector<16x96xbf16> to vector<16x16xbf16>
    %55 = vector.shape_cast %54 : vector<16x16xbf16> to vector<2x8x16xbf16>
    %56 = vector.extract_strided_slice %50 {offsets = [0, 64], sizes = [16, 16], strides = [1, 1]} : vector<16x96xbf16> to vector<16x16xbf16>
    %57 = vector.shape_cast %56 : vector<16x16xbf16> to vector<2x8x16xbf16>
    "tpu.trace_start"() <{level = 10 : i32, message = "bqd,bkd->bqk"}> : () -> ()
    %cst_28 = arith.constant dense<0.000000e+00> : vector<2x8x8xf32>
    %58 = tpu.matmul %53, %55, %cst_28 {dimension_numbers = #tpu.dot_dimension_numbers<[2], [2], [1], [1], [0, 0, 0, 1, 1, 1], [0], [0]>} : vector<2x8x16xbf16>, vector<2x8x16xbf16>, vector<2x8x8xf32> -> vector<2x8x8xf32>
    "tpu.trace_stop"() : () -> ()
    %59 = arith.addf %58, %51 : vector<2x8x8xf32>
    %cst_29 = arith.constant dense<0xFF800000> : vector<2x8xf32>
    %60 = vector.multi_reduction <maximumf>, %59, %cst_29 [2] : vector<2x8x8xf32> to vector<2x8xf32>
    %61 = vector.shape_cast %60 : vector<2x8xf32> to vector<2x8x1xf32>
    %62 = vector.broadcast %61 : vector<2x8x1xf32> to vector<2x8x8xf32>
    %63 = arith.subf %59, %62 : vector<2x8x8xf32>
    %64 = math.exp %63 : vector<2x8x8xf32>
    %cst_30 = arith.constant dense<0.000000e+00> : vector<2x8xf32>
    %65 = vector.multi_reduction <add>, %64, %cst_30 [2] : vector<2x8x8xf32> to vector<2x8xf32>
    %66 = vector.shape_cast %65 : vector<2x8xf32> to vector<2x8x1xf32>
    %67 = vector.broadcast %66 : vector<2x8x1xf32> to vector<2x8x8xf32>
    %68 = arith.divf %64, %67 : vector<2x8x8xf32>
    %69 = arith.truncf %68 : vector<2x8x8xf32> to vector<2x8x8xbf16>
    "tpu.trace_start"() <{level = 10 : i32, message = "bqk,bkd->bqd"}> : () -> ()
    %cst_31 = arith.constant dense<0.000000e+00> : vector<2x8x16xf32>
    %70 = tpu.matmul %69, %57, %cst_31 {dimension_numbers = #tpu.dot_dimension_numbers<[2], [1], [1], [2], [0, 0, 0, 1, 1, 2], [0], [0]>} : vector<2x8x8xbf16>, vector<2x8x16xbf16>, vector<2x8x16xf32> -> vector<2x8x16xf32>
    "tpu.trace_stop"() : () -> ()
    %71 = vector.shape_cast %70 : vector<2x8x16xf32> to vector<16x16xf32>
    %72 = vector.extract_strided_slice %50 {offsets = [0, 16], sizes = [16, 16], strides = [1, 1]} : vector<16x96xbf16> to vector<16x16xbf16>
    %73 = vector.shape_cast %72 : vector<16x16xbf16> to vector<2x8x16xbf16>
    %74 = vector.extract_strided_slice %50 {offsets = [0, 48], sizes = [16, 16], strides = [1, 1]} : vector<16x96xbf16> to vector<16x16xbf16>
    %75 = vector.shape_cast %74 : vector<16x16xbf16> to vector<2x8x16xbf16>
    %76 = vector.extract_strided_slice %50 {offsets = [0, 80], sizes = [16, 16], strides = [1, 1]} : vector<16x96xbf16> to vector<16x16xbf16>
    %77 = vector.shape_cast %76 : vector<16x16xbf16> to vector<2x8x16xbf16>
    "tpu.trace_start"() <{level = 10 : i32, message = "bqd,bkd->bqk"}> : () -> ()
    %cst_32 = arith.constant dense<0.000000e+00> : vector<2x8x8xf32>
    %78 = tpu.matmul %73, %75, %cst_32 {dimension_numbers = #tpu.dot_dimension_numbers<[2], [2], [1], [1], [0, 0, 0, 1, 1, 1], [0], [0]>} : vector<2x8x16xbf16>, vector<2x8x16xbf16>, vector<2x8x8xf32> -> vector<2x8x8xf32>
    "tpu.trace_stop"() : () -> ()
    %79 = arith.addf %78, %51 : vector<2x8x8xf32>
    %cst_33 = arith.constant dense<0xFF800000> : vector<2x8xf32>
    %80 = vector.multi_reduction <maximumf>, %79, %cst_33 [2] : vector<2x8x8xf32> to vector<2x8xf32>
    %81 = vector.shape_cast %80 : vector<2x8xf32> to vector<2x8x1xf32>
    %82 = vector.broadcast %81 : vector<2x8x1xf32> to vector<2x8x8xf32>
    %83 = arith.subf %79, %82 : vector<2x8x8xf32>
    %84 = math.exp %83 : vector<2x8x8xf32>
    %cst_34 = arith.constant dense<0.000000e+00> : vector<2x8xf32>
    %85 = vector.multi_reduction <add>, %84, %cst_34 [2] : vector<2x8x8xf32> to vector<2x8xf32>
    %86 = vector.shape_cast %85 : vector<2x8xf32> to vector<2x8x1xf32>
    %87 = vector.broadcast %86 : vector<2x8x1xf32> to vector<2x8x8xf32>
    %88 = arith.divf %84, %87 : vector<2x8x8xf32>
    %89 = arith.truncf %88 : vector<2x8x8xf32> to vector<2x8x8xbf16>
    "tpu.trace_start"() <{level = 10 : i32, message = "bqk,bkd->bqd"}> : () -> ()
    %cst_35 = arith.constant dense<0.000000e+00> : vector<2x8x16xf32>
    %90 = tpu.matmul %89, %77, %cst_35 {dimension_numbers = #tpu.dot_dimension_numbers<[2], [1], [1], [2], [0, 0, 0, 1, 1, 2], [0], [0]>} : vector<2x8x8xbf16>, vector<2x8x16xbf16>, vector<2x8x16xf32> -> vector<2x8x16xf32>
    "tpu.trace_stop"() : () -> ()
    %91 = vector.shape_cast %90 : vector<2x8x16xf32> to vector<16x16xf32>
    %92 = tpu.concatenate %71, %91 in 1 : vector<16x16xf32>, vector<16x16xf32> -> vector<16x32xf32>
    %93 = arith.truncf %92 : vector<16x32xf32> to vector<16x32xbf16>
    %c0_36 = arith.constant 0 : index
    %c0_37 = arith.constant 0 : index
    %c0_38 = arith.constant 0 : index
    %94 = vector.load %arg9[%c0_36, %c0_37, %c0_38] : memref<1x32x32xbf16, #tpu.memory_space<vmem>>, vector<1x32x32xbf16>
    %95 = vector.shape_cast %94 : vector<1x32x32xbf16> to vector<32x32xbf16>
    %cst_39 = arith.constant dense<0.000000e+00> : vector<16x32xf32>
    %96 = tpu.matmul %93, %95, %cst_39 {dimension_numbers = #tpu.dot_dimension_numbers<[1], [0], [0], [1], [0, 0, 1, 1], [], []>} : vector<16x32xbf16>, vector<32x32xbf16>, vector<16x32xf32> -> vector<16x32xf32>
    %c0_40 = arith.constant 0 : index
    %c0_41 = arith.constant 0 : index
    %c0_42 = arith.constant 0 : index
    %97 = vector.load %arg10[%c0_40, %c0_41, %c0_42] : memref<1x1x32xf32, #tpu.memory_space<vmem>>, vector<1x1x32xf32>
    %98 = vector.shape_cast %97 : vector<1x1x32xf32> to vector<1x32xf32>
    %99 = vector.broadcast %98 : vector<1x32xf32> to vector<16x32xf32>
    %100 = arith.addf %96, %99 : vector<16x32xf32>
    %101 = arith.addf %100, %3 : vector<16x32xf32>
    %cst_43 = arith.constant dense<0.000000e+00> : vector<16xf32>
    %102 = vector.multi_reduction <add>, %101, %cst_43 [1] : vector<16x32xf32> to vector<16xf32>
    %103 = vector.shape_cast %102 : vector<16xf32> to vector<16x1xf32>
    %cst_44 = arith.constant 3.200000e+01 : f32
    %104 = vector.broadcast %cst_44 : f32 to vector<16x1xf32>
    %105 = arith.divf %103, %104 : vector<16x1xf32>
    %106 = vector.broadcast %105 : vector<16x1xf32> to vector<16x32xf32>
    %107 = arith.subf %101, %106 : vector<16x32xf32>
    %108 = arith.mulf %107, %107 : vector<16x32xf32>
    %cst_45 = arith.constant dense<0.000000e+00> : vector<16xf32>
    %109 = vector.multi_reduction <add>, %108, %cst_45 [1] : vector<16x32xf32> to vector<16xf32>
    %110 = vector.shape_cast %109 : vector<16xf32> to vector<16x1xf32>
    %cst_46 = arith.constant 3.200000e+01 : f32
    %111 = vector.broadcast %cst_46 : f32 to vector<16x1xf32>
    %112 = arith.divf %110, %111 : vector<16x1xf32>
    %cst_47 = arith.constant 9.99999996E-13 : f32
    %113 = vector.broadcast %cst_47 : f32 to vector<16x1xf32>
    %114 = arith.addf %112, %113 : vector<16x1xf32>
    %115 = math.rsqrt %114 : vector<16x1xf32>
    %116 = vector.broadcast %115 : vector<16x1xf32> to vector<16x32xf32>
    %117 = arith.mulf %107, %116 : vector<16x32xf32>
    %c0_48 = arith.constant 0 : index
    %c0_49 = arith.constant 0 : index
    %c0_50 = arith.constant 0 : index
    %118 = vector.load %arg11[%c0_48, %c0_49, %c0_50] : memref<1x1x32xf32, #tpu.memory_space<vmem>>, vector<1x1x32xf32>
    %119 = vector.shape_cast %118 : vector<1x1x32xf32> to vector<1x32xf32>
    %120 = vector.broadcast %119 : vector<1x32xf32> to vector<16x32xf32>
    %121 = arith.mulf %117, %120 : vector<16x32xf32>
    %c0_51 = arith.constant 0 : index
    %c0_52 = arith.constant 0 : index
    %c0_53 = arith.constant 0 : index
    %122 = vector.load %arg12[%c0_51, %c0_52, %c0_53] : memref<1x1x32xf32, #tpu.memory_space<vmem>>, vector<1x1x32xf32>
    %123 = vector.shape_cast %122 : vector<1x1x32xf32> to vector<1x32xf32>
    %124 = vector.broadcast %123 : vector<1x32xf32> to vector<16x32xf32>
    %125 = arith.addf %121, %124 : vector<16x32xf32>
    %cst_54 = arith.constant 0.699999988 : f32
    %126 = vector.broadcast %cst_54 : f32 to vector<16x32xf32>
    %127 = arith.mulf %126, %42 : vector<16x32xf32>
    %cst_55 = arith.constant 3.000000e-01 : f32
    %128 = vector.broadcast %cst_55 : f32 to vector<16x32xf32>
    %129 = arith.mulf %128, %125 : vector<16x32xf32>
    %130 = arith.addf %127, %129 : vector<16x32xf32>
    %131 = arith.truncf %130 : vector<16x32xf32> to vector<16x32xbf16>
    %c0_56 = arith.constant 0 : index
    %c0_57 = arith.constant 0 : index
    %c0_58 = arith.constant 0 : index
    %132 = vector.load %arg13[%c0_56, %c0_57, %c0_58] : memref<1x32x128xbf16, #tpu.memory_space<vmem>>, vector<1x32x128xbf16>
    %133 = vector.shape_cast %132 : vector<1x32x128xbf16> to vector<32x128xbf16>
    %cst_59 = arith.constant dense<0.000000e+00> : vector<16x128xf32>
    %134 = tpu.matmul %131, %133, %cst_59 {dimension_numbers = #tpu.dot_dimension_numbers<[1], [0], [0], [1], [0, 0, 1, 1], [], []>} : vector<16x32xbf16>, vector<32x128xbf16>, vector<16x128xf32> -> vector<16x128xf32>
    %c0_60 = arith.constant 0 : index
    %c0_61 = arith.constant 0 : index
    %c0_62 = arith.constant 0 : index
    %135 = vector.load %arg14[%c0_60, %c0_61, %c0_62] : memref<1x1x128xf32, #tpu.memory_space<vmem>>, vector<1x1x128xf32>
    %136 = vector.shape_cast %135 : vector<1x1x128xf32> to vector<1x128xf32>
    %137 = vector.broadcast %136 : vector<1x128xf32> to vector<16x128xf32>
    %138 = arith.addf %134, %137 : vector<16x128xf32>
    %cst_63 = arith.constant 5.000000e-01 : f32
    %139 = vector.broadcast %cst_63 : f32 to vector<16x128xf32>
    %140 = arith.mulf %139, %138 : vector<16x128xf32>
    %cst_64 = arith.constant 0.707106769 : f32
    %141 = vector.broadcast %cst_64 : f32 to vector<16x128xf32>
    %142 = arith.mulf %138, %141 : vector<16x128xf32>
    %143 = math.erf %142 : vector<16x128xf32>
    %cst_65 = arith.constant 1.000000e+00 : f32
    %144 = vector.broadcast %cst_65 : f32 to vector<16x128xf32>
    %145 = arith.addf %144, %143 : vector<16x128xf32>
    %146 = arith.mulf %140, %145 : vector<16x128xf32>
    %147 = arith.truncf %146 : vector<16x128xf32> to vector<16x128xbf16>
    %c0_66 = arith.constant 0 : index
    %c0_67 = arith.constant 0 : index
    %c0_68 = arith.constant 0 : index
    %148 = vector.load %arg15[%c0_66, %c0_67, %c0_68] : memref<1x128x32xbf16, #tpu.memory_space<vmem>>, vector<1x128x32xbf16>
    %149 = vector.shape_cast %148 : vector<1x128x32xbf16> to vector<128x32xbf16>
    %cst_69 = arith.constant dense<0.000000e+00> : vector<16x32xf32>
    %150 = tpu.matmul %147, %149, %cst_69 {dimension_numbers = #tpu.dot_dimension_numbers<[1], [0], [0], [1], [0, 0, 1, 1], [], []>} : vector<16x128xbf16>, vector<128x32xbf16>, vector<16x32xf32> -> vector<16x32xf32>
    %c0_70 = arith.constant 0 : index
    %c0_71 = arith.constant 0 : index
    %c0_72 = arith.constant 0 : index
    %151 = vector.load %arg16[%c0_70, %c0_71, %c0_72] : memref<1x1x32xf32, #tpu.memory_space<vmem>>, vector<1x1x32xf32>
    %152 = vector.shape_cast %151 : vector<1x1x32xf32> to vector<1x32xf32>
    %153 = vector.broadcast %152 : vector<1x32xf32> to vector<16x32xf32>
    %154 = arith.addf %150, %153 : vector<16x32xf32>
    %155 = arith.addf %154, %130 : vector<16x32xf32>
    %cst_73 = arith.constant dense<0.000000e+00> : vector<16xf32>
    %156 = vector.multi_reduction <add>, %155, %cst_73 [1] : vector<16x32xf32> to vector<16xf32>
    %157 = vector.shape_cast %156 : vector<16xf32> to vector<16x1xf32>
    %cst_74 = arith.constant 3.200000e+01 : f32
    %158 = vector.broadcast %cst_74 : f32 to vector<16x1xf32>
    %159 = arith.divf %157, %158 : vector<16x1xf32>
    %160 = vector.broadcast %159 : vector<16x1xf32> to vector<16x32xf32>
    %161 = arith.subf %155, %160 : vector<16x32xf32>
    %162 = arith.mulf %161, %161 : vector<16x32xf32>
    %cst_75 = arith.constant dense<0.000000e+00> : vector<16xf32>
    %163 = vector.multi_reduction <add>, %162, %cst_75 [1] : vector<16x32xf32> to vector<16xf32>
    %164 = vector.shape_cast %163 : vector<16xf32> to vector<16x1xf32>
    %cst_76 = arith.constant 3.200000e+01 : f32
    %165 = vector.broadcast %cst_76 : f32 to vector<16x1xf32>
    %166 = arith.divf %164, %165 : vector<16x1xf32>
    %cst_77 = arith.constant 9.99999996E-13 : f32
    %167 = vector.broadcast %cst_77 : f32 to vector<16x1xf32>
    %168 = arith.addf %166, %167 : vector<16x1xf32>
    %169 = math.rsqrt %168 : vector<16x1xf32>
    %170 = vector.broadcast %169 : vector<16x1xf32> to vector<16x32xf32>
    %171 = arith.mulf %161, %170 : vector<16x32xf32>
    %c0_78 = arith.constant 0 : index
    %c0_79 = arith.constant 0 : index
    %c0_80 = arith.constant 0 : index
    %172 = vector.load %arg17[%c0_78, %c0_79, %c0_80] : memref<1x1x32xf32, #tpu.memory_space<vmem>>, vector<1x1x32xf32>
    %173 = vector.shape_cast %172 : vector<1x1x32xf32> to vector<1x32xf32>
    %174 = vector.broadcast %173 : vector<1x32xf32> to vector<16x32xf32>
    %175 = arith.mulf %171, %174 : vector<16x32xf32>
    %c0_81 = arith.constant 0 : index
    %c0_82 = arith.constant 0 : index
    %c0_83 = arith.constant 0 : index
    %176 = vector.load %arg18[%c0_81, %c0_82, %c0_83] : memref<1x1x32xf32, #tpu.memory_space<vmem>>, vector<1x1x32xf32>
    %177 = vector.shape_cast %176 : vector<1x1x32xf32> to vector<1x32xf32>
    %178 = vector.broadcast %177 : vector<1x32xf32> to vector<16x32xf32>
    %179 = arith.addf %175, %178 : vector<16x32xf32>
    %c0_84 = arith.constant 0 : index
    %c0_85 = arith.constant 0 : index
    %180 = vector.load %arg19[%c0_84, %c0_85] : memref<16x32xf32, #tpu.memory_space<vmem>>, vector<16x32xf32>
    tpu.vector_store %arg19[%c0_84, %c0_85], %179 {strides = array<i32>} : memref<16x32xf32, #tpu.memory_space<vmem>>, vector<16x32xf32>,
    return
  }
  func.func @transform_0(%arg0: i32) -> (i32, i32) {
    %c0_i32 = arith.constant 0 : i32
    %c0_i32_0 = arith.constant 0 : i32
    %c0_i32_1 = arith.constant 0 : i32
    return %c0_i32, %c0_i32_0 : i32, i32
  }
  func.func @transform_1(%arg0: i32) -> (i32, i32, i32) {
    %c0_i32 = arith.constant 0 : i32
    %c0_i32_0 = arith.constant 0 : i32
    %c0_i32_1 = arith.constant 0 : i32
    %c0_i32_2 = arith.constant 0 : i32
    return %c0_i32, %c0_i32_0, %c0_i32_1 : i32, i32, i32
  }
  func.func @transform_2(%arg0: i32) -> (i32, i32) {
    %c0_i32 = arith.constant 0 : i32
    %c0_i32_0 = arith.constant 0 : i32
    %c0_i32_1 = arith.constant 0 : i32
    return %c0_i32, %c0_i32_0 : i32, i32
  }
  func.func @transform_3(%arg0: i32) -> (i32, i32, i32) {
    %c0_i32 = arith.constant 0 : i32
    %c0_i32_0 = arith.constant 0 : i32
    %c0_i32_1 = arith.constant 0 : i32
    return %arg0, %c0_i32, %c0_i32_0 : i32, i32, i32
  }
  func.func @transform_4(%arg0: i32) -> (i32, i32, i32) {
    %c0_i32 = arith.constant 0 : i32
    %c0_i32_0 = arith.constant 0 : i32
    %c0_i32_1 = arith.constant 0 : i32
    return %arg0, %c0_i32, %c0_i32_0 : i32, i32, i32
  }
  func.func @transform_5(%arg0: i32) -> (i32, i32, i32) {
    %c0_i32 = arith.constant 0 : i32
    %c0_i32_0 = arith.constant 0 : i32
    %c0_i32_1 = arith.constant 0 : i32
    return %arg0, %c0_i32, %c0_i32_0 : i32, i32, i32
  }
  func.func @transform_6(%arg0: i32) -> (i32, i32, i32) {
    %c0_i32 = arith.constant 0 : i32
    %c0_i32_0 = arith.constant 0 : i32
    %c0_i32_1 = arith.constant 0 : i32
    return %arg0, %c0_i32, %c0_i32_0 : i32, i32, i32
  }
  func.func @transform_7(%arg0: i32) -> (i32, i32, i32) {
    %c0_i32 = arith.constant 0 : i32
    %c0_i32_0 = arith.constant 0 : i32
    %c0_i32_1 = arith.constant 0 : i32
    return %arg0, %c0_i32, %c0_i32_0 : i32, i32, i32
  }
  func.func @transform_8(%arg0: i32) -> (i32, i32, i32) {
    %c0_i32 = arith.constant 0 : i32
    %c0_i32_0 = arith.constant 0 : i32
    %c0_i32_1 = arith.constant 0 : i32
    return %arg0, %c0_i32, %c0_i32_0 : i32, i32, i32
  }
  func.func @transform_9(%arg0: i32) -> (i32, i32, i32) {
    %c0_i32 = arith.constant 0 : i32
    %c0_i32_0 = arith.constant 0 : i32
    %c0_i32_1 = arith.constant 0 : i32
    return %arg0, %c0_i32, %c0_i32_0 : i32, i32, i32
  }
  func.func @transform_10(%arg0: i32) -> (i32, i32, i32) {
    %c0_i32 = arith.constant 0 : i32
    %c0_i32_0 = arith.constant 0 : i32
    %c0_i32_1 = arith.constant 0 : i32
    return %arg0, %c0_i32, %c0_i32_0 : i32, i32, i32
  }
  func.func @transform_11(%arg0: i32) -> (i32, i32, i32) {
    %c0_i32 = arith.constant 0 : i32
    %c0_i32_0 = arith.constant 0 : i32
    %c0_i32_1 = arith.constant 0 : i32
    return %arg0, %c0_i32, %c0_i32_0 : i32, i32, i32
  }
  func.func @transform_12(%arg0: i32) -> (i32, i32, i32) {
    %c0_i32 = arith.constant 0 : i32
    %c0_i32_0 = arith.constant 0 : i32
    %c0_i32_1 = arith.constant 0 : i32
    return %arg0, %c0_i32, %c0_i32_0 : i32, i32, i32
  }
  func.func @transform_13(%arg0: i32) -> (i32, i32, i32) {
    %c0_i32 = arith.constant 0 : i32
    %c0_i32_0 = arith.constant 0 : i32
    %c0_i32_1 = arith.constant 0 : i32
    return %arg0, %c0_i32, %c0_i32_0 : i32, i32, i32
  }
  func.func @transform_14(%arg0: i32) -> (i32, i32, i32) {
    %c0_i32 = arith.constant 0 : i32
    %c0_i32_0 = arith.constant 0 : i32
    %c0_i32_1 = arith.constant 0 : i32
    return %arg0, %c0_i32, %c0_i32_0 : i32, i32, i32
  }
  func.func @transform_15(%arg0: i32) -> (i32, i32, i32) {
    %c0_i32 = arith.constant 0 : i32
    %c0_i32_0 = arith.constant 0 : i32
    %c0_i32_1 = arith.constant 0 : i32
    return %arg0, %c0_i32, %c0_i32_0 : i32, i32, i32
  }
  func.func @transform_16(%arg0: i32) -> (i32, i32, i32) {
    %c0_i32 = arith.constant 0 : i32
    %c0_i32_0 = arith.constant 0 : i32
    %c0_i32_1 = arith.constant 0 : i32
    return %arg0, %c0_i32, %c0_i32_0 : i32, i32, i32
  }
  func.func @transform_17(%arg0: i32) -> (i32, i32, i32) {
    %c0_i32 = arith.constant 0 : i32
    %c0_i32_0 = arith.constant 0 : i32
    %c0_i32_1 = arith.constant 0 : i32
    return %arg0, %c0_i32, %c0_i32_0 : i32, i32, i32
  }
  func.func @transform_18(%arg0: i32) -> (i32, i32) {
    %c0_i32 = arith.constant 0 : i32
    %c0_i32_0 = arith.constant 0 : i32
    %c0_i32_1 = arith.constant 0 : i32
    return %c0_i32, %c0_i32_0 : i32, i32
  }
}

</mosaic_0001>

<llo_original>
// kernel: tpu_custom_call.1
$region0: #{tpu_custom_call.1}
  #allocation0 [shape = 'u32[]', space=smem, size = 0x4, offset = 0x4, fixed_abs, tag = 'smem constant byte address 0x4 - core index']
  #allocation1 [shape = 'u32[144,128]{1,0:T(1,128)}', space=vmem, size = 0x12000, scoped, tag = 'internal scratch']
  %s0 = inlined_call_operand.vmem [shape: f32[16,32], index: 0, kind: input, shape index: {}]
  %s1 = inlined_call_operand.vmem [shape: f32[2,8,8], index: 1, kind: input, shape index: {}]
  %s2 = inlined_call_operand.vmem [shape: f32[8,8], index: 2, kind: input, shape index: {}]
  %s3 = inlined_call_operand.vmem [shape: f32[2,1,32], index: 3, kind: input, shape index: {}]
  %s4 = inlined_call_operand.vmem [shape: f32[2,1,32], index: 4, kind: input, shape index: {}]
  %s5 = inlined_call_operand.vmem [shape: f32[2,1,32], index: 5, kind: input, shape index: {}]
  %s6 = inlined_call_operand.vmem [shape: bf16[2,32,96], index: 6, kind: input, shape index: {}]
  %s7 = inlined_call_operand.vmem [shape: f32[2,1,96], index: 7, kind: input, shape index: {}]
  %s8 = inlined_call_operand.vmem [shape: bf16[2,32,32], index: 8, kind: input, shape index: {}]
  %s9 = inlined_call_operand.vmem [shape: f32[2,1,32], index: 9, kind: input, shape index: {}]
  %s10 = inlined_call_operand.vmem [shape: f32[2,1,32], index: 10, kind: input, shape index: {}]
  %s11 = inlined_call_operand.vmem [shape: f32[2,1,32], index: 11, kind: input, shape index: {}]
  %s12 = inlined_call_operand.vmem [shape: bf16[2,32,128], index: 12, kind: input, shape index: {}]
  %s13 = inlined_call_operand.vmem [shape: f32[2,1,128], index: 13, kind: input, shape index: {}]
  %s14 = inlined_call_operand.vmem [shape: bf16[2,128,32], index: 14, kind: input, shape index: {}]
  %s15 = inlined_call_operand.vmem [shape: f32[2,1,32], index: 15, kind: input, shape index: {}]
  %s16 = inlined_call_operand.vmem [shape: f32[2,1,32], index: 16, kind: input, shape index: {}]
  %s17 = inlined_call_operand.vmem [shape: f32[2,1,32], index: 17, kind: input, shape index: {}]
  %s18 = inlined_call_operand.hbm [shape: f32[16,32], index: 18, kind: output, shape index: {}]
  %s19 = sld [smem:[#allocation0]]
  $region109: #{tpu_custom_call.1} parent=0
    _
  %s21 = ssub.s32 1, %s19
  %s22 = scalar_select 0, %s21, %s19
  $region1: #{tpu_custom_call.1} parent=0
    #allocation2 [shape = 'u8[8192]{0}', space=vmem, size = 0x2000, scoped, tag = 'output window, operand 0, single buffered']
    #allocation3 [shape = 's32[2]{0}', space=sflag, size = 0x8, scoped, tag = 'scoped memory for tpu_custom_call.1']
    %23 = vsyncpa [#allocation3], 0
    loop: start=0, step=1, limit=4
    $region2: #{tpu_custom_call.1} parent=1 // loop_pre_header
      _
    $region3: #{tpu_custom_call.1} parent=1 // loop_header
      %s25 = sphi 0, %s29
      %p26 = scmp.ge.s32.totalorder %s25, 4
      %s33 = sphi 0, %s33
      %s35 = sphi 0, %s33
      %s36 = sphi 0, %s35
      %s50 = sphi 0, %s36
      %s54 = sphi 0, %s54
      %s56 = sphi 0, %s54
      %s57 = sphi 0, %s56
      %s71 = sphi 0, %s57
      %s75 = sphi 0, %s75
      %s77 = sphi 0, %s75
      %s78 = sphi 0, %s77
      %s92 = sphi 0, %s78
      %s98 = sphi 0, %s100
      %s101 = sphi 0, %s98
      %s102 = sphi 0, %s101
      %s118 = sphi 0, %s102
      %s124 = sphi 0, %s126
      %s127 = sphi 0, %s124
      %s128 = sphi 0, %s127
      %s144 = sphi 0, %s128
      %s150 = sphi 0, %s152
      %s153 = sphi 0, %s150
      %s154 = sphi 0, %s153
      %s170 = sphi 0, %s154
      %s176 = sphi 0, %s178
      %s179 = sphi 0, %s176
      %s180 = sphi 0, %s179
      %s196 = sphi 0, %s180
      %s202 = sphi 0, %s204
      %s205 = sphi 0, %s202
      %s206 = sphi 0, %s205
      %s222 = sphi 0, %s206
      %s228 = sphi 0, %s230
      %s231 = sphi 0, %s228
      %s232 = sphi 0, %s231
      %s248 = sphi 0, %s232
      %s254 = sphi 0, %s256
      %s257 = sphi 0, %s254
      %s258 = sphi 0, %s257
      %s274 = sphi 0, %s258
      %s280 = sphi 0, %s282
      %s283 = sphi 0, %s280
      %s284 = sphi 0, %s283
      %s300 = sphi 0, %s284
      %s306 = sphi 0, %s308
      %s309 = sphi 0, %s306
      %s310 = sphi 0, %s309
      %s326 = sphi 0, %s310
      %s332 = sphi 0, %s334
      %s335 = sphi 0, %s332
      %s336 = sphi 0, %s335
      %s352 = sphi 0, %s336
      %s358 = sphi 0, %s360
      %s361 = sphi 0, %s358
      %s362 = sphi 0, %s361
      %s378 = sphi 0, %s362
      %s384 = sphi 0, %s386
      %s387 = sphi 0, %s384
      %s388 = sphi 0, %s387
      %s404 = sphi 0, %s388
      %s410 = sphi 0, %s412
      %s413 = sphi 0, %s410
      %s414 = sphi 0, %s413
      %s430 = sphi 0, %s414
      %s436 = sphi 0, %s438
      %s439 = sphi 0, %s436
      %s440 = sphi 0, %s439
      %s456 = sphi 0, %s440
      %s462 = sphi 0, %s464
      %s465 = sphi 0, %s462
      %s466 = sphi 0, %s465
      %s482 = sphi 0, %s466
      %s486 = sphi 0, %s486
      %s488 = sphi 0, %s486
      %s489 = sphi 0, %s488
      %s503 = sphi 0, %s489
    $region4: #{tpu_custom_call.1} parent=1 // loop_header_branch
      %28 = sbr.rel (%p26) target = $region8
    $region5: #{tpu_custom_call.1} parent=1 // loop_body
      %s30 = ssub.s32 %s25, 1
      %s31 = ssub.s32 %s25, 2
      %s32 = sadd.s32 %s25, 1
      %s34 = sadd.s32 %s33, 1
      %p37 = scmp.eq.s32.totalorder %s25, 1
      %p38 = scmp.ne.s32.totalorder %s33, %s35
      %p39 = scmp.eq.s32.totalorder %s25, 0
      %p40 = por %p38, %p39
      %p41 = scmp.ne.s32.totalorder %s33, %s35
      %p42 = scmp.eq.s32.totalorder %s30, 1
      %p43 = por %p41, %p42
      %p44 = scmp.ne.s32.totalorder %s35, %s36
      %p45 = scmp.eq.s32.totalorder %s30, 0
      %p46 = por %p44, %p45
      %p47 = scmp.ne.s32.totalorder %s35, %s36
      %p48 = scmp.eq.s32.totalorder %s31, 1
      %p49 = por %p47, %p48
      %p51 = scmp.ne.s32.totalorder %s36, %s50
      %p52 = scmp.eq.s32.totalorder %s31, 0
      %p53 = por %p51, %p52
      %s55 = sadd.s32 %s54, 1
      %p58 = scmp.eq.s32.totalorder %s25, 1
      %p59 = scmp.ne.s32.totalorder %s54, %s56
      %p60 = scmp.eq.s32.totalorder %s25, 0
      %p61 = por %p59, %p60
      %p62 = scmp.ne.s32.totalorder %s54, %s56
      %p63 = scmp.eq.s32.totalorder %s30, 1
      %p64 = por %p62, %p63
      %p65 = scmp.ne.s32.totalorder %s56, %s57
      %p66 = scmp.eq.s32.totalorder %s30, 0
      %p67 = por %p65, %p66
      %p68 = scmp.ne.s32.totalorder %s56, %s57
      %p69 = scmp.eq.s32.totalorder %s31, 1
      %p70 = por %p68, %p69
      %p72 = scmp.ne.s32.totalorder %s57, %s71
      %p73 = scmp.eq.s32.totalorder %s31, 0
      %p74 = por %p72, %p73
      %s76 = sadd.s32 %s75, 1
      %p79 = scmp.eq.s32.totalorder %s25, 1
      %p80 = scmp.ne.s32.totalorder %s75, %s77
      %p81 = scmp.eq.s32.totalorder %s25, 0
      %p82 = por %p80, %p81
      %p83 = scmp.ne.s32.totalorder %s75, %s77
      %p84 = scmp.eq.s32.totalorder %s30, 1
      %p85 = por %p83, %p84
      %p86 = scmp.ne.s32.totalorder %s77, %s78
      %p87 = scmp.eq.s32.totalorder %s30, 0
      %p88 = por %p86, %p87
      %p89 = scmp.ne.s32.totalorder %s77, %s78
      %p90 = scmp.eq.s32.totalorder %s31, 1
      %p91 = por %p89, %p90
      %p93 = scmp.ne.s32.totalorder %s78, %s92
      %p94 = scmp.eq.s32.totalorder %s31, 0
      %p95 = por %p93, %p94
      %s96 = ssub.s32 %s25, %s32
      %p97 = scmp.eq.s32.totalorder %s96, 0
      %s99 = sadd.s32 %s98, 1
      %s100 = scalar_select %p97, %s98, %s99
      %p103 = pneg %p97
      %p104 = scmp.eq.s32.totalorder %s25, 1
      %p105 = por %p103, %p104
      %p106 = scmp.ne.s32.totalorder %s98, %s101
      %p107 = scmp.eq.s32.totalorder %s25, 0
      %p108 = por %p106, %p107
      %p109 = scmp.ne.s32.totalorder %s98, %s101
      %p110 = scmp.eq.s32.totalorder %s30, 1
      %p111 = por %p109, %p110
      %p112 = scmp.ne.s32.totalorder %s101, %s102
      %p113 = scmp.eq.s32.totalorder %s30, 0
      %p114 = por %p112, %p113
      %p115 = scmp.ne.s32.totalorder %s101, %s102
      %p116 = scmp.eq.s32.totalorder %s31, 1
      %p117 = por %p115, %p116
      %p119 = scmp.ne.s32.totalorder %s102, %s118
      %p120 = scmp.eq.s32.totalorder %s31, 0
      %p121 = por %p119, %p120
      %s122 = ssub.s32 %s25, %s32
      %p123 = scmp.eq.s32.totalorder %s122, 0
      %s125 = sadd.s32 %s124, 1
      %s126 = scalar_select %p123, %s124, %s125
      %p129 = pneg %p123
      %p130 = scmp.eq.s32.totalorder %s25, 1
      %p131 = por %p129, %p130
      %p132 = scmp.ne.s32.totalorder %s124, %s127
      %p133 = scmp.eq.s32.totalorder %s25, 0
      %p134 = por %p132, %p133
      %p135 = scmp.ne.s32.totalorder %s124, %s127
      %p136 = scmp.eq.s32.totalorder %s30, 1
      %p137 = por %p135, %p136
      %p138 = scmp.ne.s32.totalorder %s127, %s128
      %p139 = scmp.eq.s32.totalorder %s30, 0
      %p140 = por %p138, %p139
      %p141 = scmp.ne.s32.totalorder %s127, %s128
      %p142 = scmp.eq.s32.totalorder %s31, 1
      %p143 = por %p141, %p142
      %p145 = scmp.ne.s32.totalorder %s128, %s144
      %p146 = scmp.eq.s32.totalorder %s31, 0
      %p147 = por %p145, %p146
      %s148 = ssub.s32 %s25, %s32
      %p149 = scmp.eq.s32.totalorder %s148, 0
      %s151 = sadd.s32 %s150, 1
      %s152 = scalar_select %p149, %s150, %s151
      %p155 = pneg %p149
      %p156 = scmp.eq.s32.totalorder %s25, 1
      %p157 = por %p155, %p156
      %p158 = scmp.ne.s32.totalorder %s150, %s153
      %p159 = scmp.eq.s32.totalorder %s25, 0
      %p160 = por %p158, %p159
      %p161 = scmp.ne.s32.totalorder %s150, %s153
      %p162 = scmp.eq.s32.totalorder %s30, 1
      %p163 = por %p161, %p162
      %p164 = scmp.ne.s32.totalorder %s153, %s154
      %p165 = scmp.eq.s32.totalorder %s30, 0
      %p166 = por %p164, %p165
      %p167 = scmp.ne.s32.totalorder %s153, %s154
      %p168 = scmp.eq.s32.totalorder %s31, 1
      %p169 = por %p167, %p168
      %p171 = scmp.ne.s32.totalorder %s154, %s170
      %p172 = scmp.eq.s32.totalorder %s31, 0
      %p173 = por %p171, %p172
      %s174 = ssub.s32 %s25, %s32
      %p175 = scmp.eq.s32.totalorder %s174, 0
      %s177 = sadd.s32 %s176, 1
      %s178 = scalar_select %p175, %s176, %s177
      %p181 = pneg %p175
      %p182 = scmp.eq.s32.totalorder %s25, 1
      %p183 = por %p181, %p182
      %p184 = scmp.ne.s32.totalorder %s176, %s179
      %p185 = scmp.eq.s32.totalorder %s25, 0
      %p186 = por %p184, %p185
      %p187 = scmp.ne.s32.totalorder %s176, %s179
      %p188 = scmp.eq.s32.totalorder %s30, 1
      %p189 = por %p187, %p188
      %p190 = scmp.ne.s32.totalorder %s179, %s180
      %p191 = scmp.eq.s32.totalorder %s30, 0
      %p192 = por %p190, %p191
      %p193 = scmp.ne.s32.totalorder %s179, %s180
      %p194 = scmp.eq.s32.totalorder %s31, 1
      %p195 = por %p193, %p194
      %p197 = scmp.ne.s32.totalorder %s180, %s196
      %p198 = scmp.eq.s32.totalorder %s31, 0
      %p199 = por %p197, %p198
      %s200 = ssub.s32 %s25, %s32
      %p201 = scmp.eq.s32.totalorder %s200, 0
      %s203 = sadd.s32 %s202, 1
      %s204 = scalar_select %p201, %s202, %s203
      %p207 = pneg %p201
      %p208 = scmp.eq.s32.totalorder %s25, 1
      %p209 = por %p207, %p208
      %p210 = scmp.ne.s32.totalorder %s202, %s205
      %p211 = scmp.eq.s32.totalorder %s25, 0
      %p212 = por %p210, %p211
      %p213 = scmp.ne.s32.totalorder %s202, %s205
      %p214 = scmp.eq.s32.totalorder %s30, 1
      %p215 = por %p213, %p214
      %p216 = scmp.ne.s32.totalorder %s205, %s206
      %p217 = scmp.eq.s32.totalorder %s30, 0
      %p218 = por %p216, %p217
      %p219 = scmp.ne.s32.totalorder %s205, %s206
      %p220 = scmp.eq.s32.totalorder %s31, 1
      %p221 = por %p219, %p220
      %p223 = scmp.ne.s32.totalorder %s206, %s222
      %p224 = scmp.eq.s32.totalorder %s31, 0
      %p225 = por %p223, %p224
      %s226 = ssub.s32 %s25, %s32
      %p227 = scmp.eq.s32.totalorder %s226, 0
      %s229 = sadd.s32 %s228, 1
      %s230 = scalar_select %p227, %s228, %s229
      %p233 = pneg %p227
      %p234 = scmp.eq.s32.totalorder %s25, 1
      %p235 = por %p233, %p234
      %p236 = scmp.ne.s32.totalorder %s228, %s231
      %p237 = scmp.eq.s32.totalorder %s25, 0
      %p238 = por %p236, %p237
      %p239 = scmp.ne.s32.totalorder %s228, %s231
      %p240 = scmp.eq.s32.totalorder %s30, 1
      %p241 = por %p239, %p240
      %p242 = scmp.ne.s32.totalorder %s231, %s232
      %p243 = scmp.eq.s32.totalorder %s30, 0
      %p244 = por %p242, %p243
      %p245 = scmp.ne.s32.totalorder %s231, %s232
      %p246 = scmp.eq.s32.totalorder %s31, 1
      %p247 = por %p245, %p246
      %p249 = scmp.ne.s32.totalorder %s232, %s248
      %p250 = scmp.eq.s32.totalorder %s31, 0
      %p251 = por %p249, %p250
      %s252 = ssub.s32 %s25, %s32
      %p253 = scmp.eq.s32.totalorder %s252, 0
      %s255 = sadd.s32 %s254, 1
      %s256 = scalar_select %p253, %s254, %s255
      %p259 = pneg %p253
      %p260 = scmp.eq.s32.totalorder %s25, 1
      %p261 = por %p259, %p260
      %p262 = scmp.ne.s32.totalorder %s254, %s257
      %p263 = scmp.eq.s32.totalorder %s25, 0
      %p264 = por %p262, %p263
      %p265 = scmp.ne.s32.totalorder %s254, %s257
      %p266 = scmp.eq.s32.totalorder %s30, 1
      %p267 = por %p265, %p266
      %p268 = scmp.ne.s32.totalorder %s257, %s258
      %p269 = scmp.eq.s32.totalorder %s30, 0
      %p270 = por %p268, %p269
      %p271 = scmp.ne.s32.totalorder %s257, %s258
      %p272 = scmp.eq.s32.totalorder %s31, 1
      %p273 = por %p271, %p272
      %p275 = scmp.ne.s32.totalorder %s258, %s274
      %p276 = scmp.eq.s32.totalorder %s31, 0
      %p277 = por %p275, %p276
      %s278 = ssub.s32 %s25, %s32
      %p279 = scmp.eq.s32.totalorder %s278, 0
      %s281 = sadd.s32 %s280, 1
      %s282 = scalar_select %p279, %s280, %s281
      %p285 = pneg %p279
      %p286 = scmp.eq.s32.totalorder %s25, 1
      %p287 = por %p285, %p286
      %p288 = scmp.ne.s32.totalorder %s280, %s283
      %p289 = scmp.eq.s32.totalorder %s25, 0
      %p290 = por %p288, %p289
      %p291 = scmp.ne.s32.totalorder %s280, %s283
      %p292 = scmp.eq.s32.totalorder %s30, 1
      %p293 = por %p291, %p292
      %p294 = scmp.ne.s32.totalorder %s283, %s284
      %p295 = scmp.eq.s32.totalorder %s30, 0
      %p296 = por %p294, %p295
      %p297 = scmp.ne.s32.totalorder %s283, %s284
      %p298 = scmp.eq.s32.totalorder %s31, 1
      %p299 = por %p297, %p298
      %p301 = scmp.ne.s32.totalorder %s284, %s300
      %p302 = scmp.eq.s32.totalorder %s31, 0
      %p303 = por %p301, %p302
      %s304 = ssub.s32 %s25, %s32
      %p305 = scmp.eq.s32.totalorder %s304, 0
      %s307 = sadd.s32 %s306, 1
      %s308 = scalar_select %p305, %s306, %s307
      %p311 = pneg %p305
      %p312 = scmp.eq.s32.totalorder %s25, 1
      %p313 = por %p311, %p312
      %p314 = scmp.ne.s32.totalorder %s306, %s309
      %p315 = scmp.eq.s32.totalorder %s25, 0
      %p316 = por %p314, %p315
      %p317 = scmp.ne.s32.totalorder %s306, %s309
      %p318 = scmp.eq.s32.totalorder %s30, 1
      %p319 = por %p317, %p318
      %p320 = scmp.ne.s32.totalorder %s309, %s310
      %p321 = scmp.eq.s32.totalorder %s30, 0
      %p322 = por %p320, %p321
      %p323 = scmp.ne.s32.totalorder %s309, %s310
      %p324 = scmp.eq.s32.totalorder %s31, 1
      %p325 = por %p323, %p324
      %p327 = scmp.ne.s32.totalorder %s310, %s326
      %p328 = scmp.eq.s32.totalorder %s31, 0
      %p329 = por %p327, %p328
      %s330 = ssub.s32 %s25, %s32
      %p331 = scmp.eq.s32.totalorder %s330, 0
      %s333 = sadd.s32 %s332, 1
      %s334 = scalar_select %p331, %s332, %s333
      %p337 = pneg %p331
      %p338 = scmp.eq.s32.totalorder %s25, 1
      %p339 = por %p337, %p338
      %p340 = scmp.ne.s32.totalorder %s332, %s335
      %p341 = scmp.eq.s32.totalorder %s25, 0
      %p342 = por %p340, %p341
      %p343 = scmp.ne.s32.totalorder %s332, %s335
      %p344 = scmp.eq.s32.totalorder %s30, 1
      %p345 = por %p343, %p344
      %p346 = scmp.ne.s32.totalorder %s335, %s336
      %p347 = scmp.eq.s32.totalorder %s30, 0
      %p348 = por %p346, %p347
      %p349 = scmp.ne.s32.totalorder %s335, %s336
      %p350 = scmp.eq.s32.totalorder %s31, 1
      %p351 = por %p349, %p350
      %p353 = scmp.ne.s32.totalorder %s336, %s352
      %p354 = scmp.eq.s32.totalorder %s31, 0
      %p355 = por %p353, %p354
      %s356 = ssub.s32 %s25, %s32
      %p357 = scmp.eq.s32.totalorder %s356, 0
      %s359 = sadd.s32 %s358, 1
      %s360 = scalar_select %p357, %s358, %s359
      %p363 = pneg %p357
      %p364 = scmp.eq.s32.totalorder %s25, 1
      %p365 = por %p363, %p364
      %p366 = scmp.ne.s32.totalorder %s358, %s361
      %p367 = scmp.eq.s32.totalorder %s25, 0
      %p368 = por %p366, %p367
      %p369 = scmp.ne.s32.totalorder %s358, %s361
      %p370 = scmp.eq.s32.totalorder %s30, 1
      %p371 = por %p369, %p370
      %p372 = scmp.ne.s32.totalorder %s361, %s362
      %p373 = scmp.eq.s32.totalorder %s30, 0
      %p374 = por %p372, %p373
      %p375 = scmp.ne.s32.totalorder %s361, %s362
      %p376 = scmp.eq.s32.totalorder %s31, 1
      %p377 = por %p375, %p376
      %p379 = scmp.ne.s32.totalorder %s362, %s378
      %p380 = scmp.eq.s32.totalorder %s31, 0
      %p381 = por %p379, %p380
      %s382 = ssub.s32 %s25, %s32
      %p383 = scmp.eq.s32.totalorder %s382, 0
      %s385 = sadd.s32 %s384, 1
      %s386 = scalar_select %p383, %s384, %s385
      %p389 = pneg %p383
      %p390 = scmp.eq.s32.totalorder %s25, 1
      %p391 = por %p389, %p390
      %p392 = scmp.ne.s32.totalorder %s384, %s387
      %p393 = scmp.eq.s32.totalorder %s25, 0
      %p394 = por %p392, %p393
      %p395 = scmp.ne.s32.totalorder %s384, %s387
      %p396 = scmp.eq.s32.totalorder %s30, 1
      %p397 = por %p395, %p396
      %p398 = scmp.ne.s32.totalorder %s387, %s388
      %p399 = scmp.eq.s32.totalorder %s30, 0
      %p400 = por %p398, %p399
      %p401 = scmp.ne.s32.totalorder %s387, %s388
      %p402 = scmp.eq.s32.totalorder %s31, 1
      %p403 = por %p401, %p402
      %p405 = scmp.ne.s32.totalorder %s388, %s404
      %p406 = scmp.eq.s32.totalorder %s31, 0
      %p407 = por %p405, %p406
      %s408 = ssub.s32 %s25, %s32
      %p409 = scmp.eq.s32.totalorder %s408, 0
      %s411 = sadd.s32 %s410, 1
      %s412 = scalar_select %p409, %s410, %s411
      %p415 = pneg %p409
      %p416 = scmp.eq.s32.totalorder %s25, 1
      %p417 = por %p415, %p416
      %p418 = scmp.ne.s32.totalorder %s410, %s413
      %p419 = scmp.eq.s32.totalorder %s25, 0
      %p420 = por %p418, %p419
      %p421 = scmp.ne.s32.totalorder %s410, %s413
      %p422 = scmp.eq.s32.totalorder %s30, 1
      %p423 = por %p421, %p422
      %p424 = scmp.ne.s32.totalorder %s413, %s414
      %p425 = scmp.eq.s32.totalorder %s30, 0
      %p426 = por %p424, %p425
      %p427 = scmp.ne.s32.totalorder %s413, %s414
      %p428 = scmp.eq.s32.totalorder %s31, 1
      %p429 = por %p427, %p428
      %p431 = scmp.ne.s32.totalorder %s414, %s430
      %p432 = scmp.eq.s32.totalorder %s31, 0
      %p433 = por %p431, %p432
      %s434 = ssub.s32 %s25, %s32
      %p435 = scmp.eq.s32.totalorder %s434, 0
      %s437 = sadd.s32 %s436, 1
      %s438 = scalar_select %p435, %s436, %s437
      %p441 = pneg %p435
      %p442 = scmp.eq.s32.totalorder %s25, 1
      %p443 = por %p441, %p442
      %p444 = scmp.ne.s32.totalorder %s436, %s439
      %p445 = scmp.eq.s32.totalorder %s25, 0
      %p446 = por %p444, %p445
      %p447 = scmp.ne.s32.totalorder %s436, %s439
      %p448 = scmp.eq.s32.totalorder %s30, 1
      %p449 = por %p447, %p448
      %p450 = scmp.ne.s32.totalorder %s439, %s440
      %p451 = scmp.eq.s32.totalorder %s30, 0
      %p452 = por %p450, %p451
      %p453 = scmp.ne.s32.totalorder %s439, %s440
      %p454 = scmp.eq.s32.totalorder %s31, 1
      %p455 = por %p453, %p454
      %p457 = scmp.ne.s32.totalorder %s440, %s456
      %p458 = scmp.eq.s32.totalorder %s31, 0
      %p459 = por %p457, %p458
      %s460 = ssub.s32 %s25, %s32
      %p461 = scmp.eq.s32.totalorder %s460, 0
      %s463 = sadd.s32 %s462, 1
      %s464 = scalar_select %p461, %s462, %s463
      %p467 = pneg %p461
      %p468 = scmp.eq.s32.totalorder %s25, 1
      %p469 = por %p467, %p468
      %p470 = scmp.ne.s32.totalorder %s462, %s465
      %p471 = scmp.eq.s32.totalorder %s25, 0
      %p472 = por %p470, %p471
      %p473 = scmp.ne.s32.totalorder %s462, %s465
      %p474 = scmp.eq.s32.totalorder %s30, 1
      %p475 = por %p473, %p474
      %p476 = scmp.ne.s32.totalorder %s465, %s466
      %p477 = scmp.eq.s32.totalorder %s30, 0
      %p478 = por %p476, %p477
      %p479 = scmp.ne.s32.totalorder %s465, %s466
      %p480 = scmp.eq.s32.totalorder %s31, 1
      %p481 = por %p479, %p480
      %p483 = scmp.ne.s32.totalorder %s466, %s482
      %p484 = scmp.eq.s32.totalorder %s31, 0
      %p485 = por %p483, %p484
      %s487 = sadd.s32 %s486, 1
      %p490 = scmp.eq.s32.totalorder %s25, 1
      %p491 = scmp.ne.s32.totalorder %s486, %s488
      %p492 = scmp.eq.s32.totalorder %s25, 0
      %p493 = por %p491, %p492
      %p494 = scmp.ne.s32.totalorder %s486, %s488
      %p495 = scmp.eq.s32.totalorder %s30, 1
      %p496 = por %p494, %p495
      %p497 = scmp.ne.s32.totalorder %s488, %s489
      %p498 = scmp.eq.s32.totalorder %s30, 0
      %p499 = por %p497, %p498
      %p500 = scmp.ne.s32.totalorder %s488, %s489
      %p501 = scmp.eq.s32.totalorder %s31, 1
      %p502 = por %p500, %p501
      %p504 = scmp.ne.s32.totalorder %s489, %s503
      %p505 = scmp.eq.s32.totalorder %s31, 0
      %p506 = por %p504, %p505
      %p507 = scmp.le.s32.totalorder 1, %s25
      %p508 = scmp.lt.s32.totalorder %s25, 3
      %p509 = pnand %p507, %p508
      %p510 = pneg %p509
      // Predicated region
      $region9: #{tpu_custom_call.1} parent=5 // pred_check
        _
      $region10: #{tpu_custom_call.1} parent=5 // pred_check_branch
        %512 = sbr.rel (%p509) target = $region12
      $region11: #{tpu_custom_call.1} parent=5 // pred_region
        %s513 = ssub.s32 %s25, 1
        // Predicated region
        $region13: #{tpu_custom_call.1} parent=11 // pred_check
          %p514 = pneg %p46
        $region14: #{tpu_custom_call.1} parent=11 // pred_check_branch
          %516 = sbr.rel (%p514) target = $region16
        $region15: #{tpu_custom_call.1} parent=11 // pred_region
          _
        $region16: #{tpu_custom_call.1} parent=11 // pred_fallthru
          _
        // Predicated region
        $region17: #{tpu_custom_call.1} parent=11 // pred_check
          %p517 = pneg %p67
        $region18: #{tpu_custom_call.1} parent=11 // pred_check_branch
          %519 = sbr.rel (%p517) target = $region20
        $region19: #{tpu_custom_call.1} parent=11 // pred_region
          _
        $region20: #{tpu_custom_call.1} parent=11 // pred_fallthru
          _
        // Predicated region
        $region21: #{tpu_custom_call.1} parent=11 // pred_check
          %p520 = pneg %p88
        $region22: #{tpu_custom_call.1} parent=11 // pred_check_branch
          %522 = sbr.rel (%p520) target = $region24
        $region23: #{tpu_custom_call.1} parent=11 // pred_region
          _
        $region24: #{tpu_custom_call.1} parent=11 // pred_fallthru
          _
      $region12: #{tpu_custom_call.1} parent=5 // pred_fallthru
        _
      %p523 = scmp.lt.s32.totalorder %s25, 2
      // Predicated region
      $region25: #{tpu_custom_call.1} parent=5 // pred_check
        %p524 = pneg %p523
      $region26: #{tpu_custom_call.1} parent=5 // pred_check_branch
        %526 = sbr.rel (%p524) target = $region28
      $region27: #{tpu_custom_call.1} parent=5 // pred_region
        // Predicated region
        $region29: #{tpu_custom_call.1} parent=27 // pred_check
          %p527 = pneg %p108
        $region30: #{tpu_custom_call.1} parent=27 // pred_check_branch
          %529 = sbr.rel (%p527) target = $region32
        $region31: #{tpu_custom_call.1} parent=27 // pred_region
          %p530 = scmp.lt.s32.totalorder %s25, 1
          %s531 = scalar_select %p530, %s25, 1
          %s532 = scalar_lea.vmem %s3, %s531
        $region32: #{tpu_custom_call.1} parent=27 // pred_fallthru
          _
        // Predicated region
        $region33: #{tpu_custom_call.1} parent=27 // pred_check
          %p533 = pneg %p134
        $region34: #{tpu_custom_call.1} parent=27 // pred_check_branch
          %535 = sbr.rel (%p533) target = $region36
        $region35: #{tpu_custom_call.1} parent=27 // pred_region
          %p536 = scmp.lt.s32.totalorder %s25, 1
          %s537 = scalar_select %p536, %s25, 1
          %s538 = scalar_lea.vmem %s4, %s537
        $region36: #{tpu_custom_call.1} parent=27 // pred_fallthru
          _
        // Predicated region
        $region37: #{tpu_custom_call.1} parent=27 // pred_check
          %p539 = pneg %p160
        $region38: #{tpu_custom_call.1} parent=27 // pred_check_branch
          %541 = sbr.rel (%p539) target = $region40
        $region39: #{tpu_custom_call.1} parent=27 // pred_region
          %p542 = scmp.lt.s32.totalorder %s25, 1
          %s543 = scalar_select %p542, %s25, 1
          %s544 = scalar_lea.vmem %s5, %s543
        $region40: #{tpu_custom_call.1} parent=27 // pred_fallthru
          _
        // Predicated region
        $region41: #{tpu_custom_call.1} parent=27 // pred_check
          %p545 = pneg %p186
        $region42: #{tpu_custom_call.1} parent=27 // pred_check_branch
          %547 = sbr.rel (%p545) target = $region44
        $region43: #{tpu_custom_call.1} parent=27 // pred_region
          %p548 = scmp.lt.s32.totalorder %s25, 1
          %s549 = scalar_select %p548, %s25, 1
          %s550 = smul.addr %s549, 4
          %s551 = smul.addr %s550, 4
          %s552 = scalar_lea.vmem %s6, %s551
        $region44: #{tpu_custom_call.1} parent=27 // pred_fallthru
          _
        // Predicated region
        $region45: #{tpu_custom_call.1} parent=27 // pred_check
          %p553 = pneg %p212
        $region46: #{tpu_custom_call.1} parent=27 // pred_check_branch
          %555 = sbr.rel (%p553) target = $region48
        $region47: #{tpu_custom_call.1} parent=27 // pred_region
          %p556 = scmp.lt.s32.totalorder %s25, 1
          %s557 = scalar_select %p556, %s25, 1
          %s558 = scalar_lea.vmem %s7, %s557
        $region48: #{tpu_custom_call.1} parent=27 // pred_fallthru
          _
        // Predicated region
        $region49: #{tpu_custom_call.1} parent=27 // pred_check
          %p559 = pneg %p238
        $region50: #{tpu_custom_call.1} parent=27 // pred_check_branch
          %561 = sbr.rel (%p559) target = $region52
        $region51: #{tpu_custom_call.1} parent=27 // pred_region
          %p562 = scmp.lt.s32.totalorder %s25, 1
          %s563 = scalar_select %p562, %s25, 1
          %s564 = smul.addr %s563, 4
          %s565 = smul.addr %s564, 4
          %s566 = scalar_lea.vmem %s8, %s565
        $region52: #{tpu_custom_call.1} parent=27 // pred_fallthru
          _
        // Predicated region
        $region53: #{tpu_custom_call.1} parent=27 // pred_check
          %p567 = pneg %p264
        $region54: #{tpu_custom_call.1} parent=27 // pred_check_branch
          %569 = sbr.rel (%p567) target = $region56
        $region55: #{tpu_custom_call.1} parent=27 // pred_region
          %p570 = scmp.lt.s32.totalorder %s25, 1
          %s571 = scalar_select %p570, %s25, 1
          %s572 = scalar_lea.vmem %s9, %s571
        $region56: #{tpu_custom_call.1} parent=27 // pred_fallthru
          _
        // Predicated region
        $region57: #{tpu_custom_call.1} parent=27 // pred_check
          %p573 = pneg %p290
        $region58: #{tpu_custom_call.1} parent=27 // pred_check_branch
          %575 = sbr.rel (%p573) target = $region60
        $region59: #{tpu_custom_call.1} parent=27 // pred_region
          %p576 = scmp.lt.s32.totalorder %s25, 1
          %s577 = scalar_select %p576, %s25, 1
          %s578 = scalar_lea.vmem %s10, %s577
        $region60: #{tpu_custom_call.1} parent=27 // pred_fallthru
          _
        // Predicated region
        $region61: #{tpu_custom_call.1} parent=27 // pred_check
          %p579 = pneg %p316
        $region62: #{tpu_custom_call.1} parent=27 // pred_check_branch
          %581 = sbr.rel (%p579) target = $region64
        $region63: #{tpu_custom_call.1} parent=27 // pred_region
          %p582 = scmp.lt.s32.totalorder %s25, 1
          %s583 = scalar_select %p582, %s25, 1
          %s584 = scalar_lea.vmem %s11, %s583
        $region64: #{tpu_custom_call.1} parent=27 // pred_fallthru
          _
        // Predicated region
        $region65: #{tpu_custom_call.1} parent=27 // pred_check
          %p585 = pneg %p342
        $region66: #{tpu_custom_call.1} parent=27 // pred_check_branch
          %587 = sbr.rel (%p585) target = $region68
        $region67: #{tpu_custom_call.1} parent=27 // pred_region
          %p588 = scmp.lt.s32.totalorder %s25, 1
          %s589 = scalar_select %p588, %s25, 1
          %s590 = smul.addr %s589, 4
          %s591 = smul.addr %s590, 4
          %s592 = scalar_lea.vmem %s12, %s591
        $region68: #{tpu_custom_call.1} parent=27 // pred_fallthru
          _
        // Predicated region
        $region69: #{tpu_custom_call.1} parent=27 // pred_check
          %p593 = pneg %p368
        $region70: #{tpu_custom_call.1} parent=27 // pred_check_branch
          %595 = sbr.rel (%p593) target = $region72
        $region71: #{tpu_custom_call.1} parent=27 // pred_region
          %p596 = scmp.lt.s32.totalorder %s25, 1
          %s597 = scalar_select %p596, %s25, 1
          %s598 = scalar_lea.vmem %s13, %s597
        $region72: #{tpu_custom_call.1} parent=27 // pred_fallthru
          _
        // Predicated region
        $region73: #{tpu_custom_call.1} parent=27 // pred_check
          %p599 = pneg %p394
        $region74: #{tpu_custom_call.1} parent=27 // pred_check_branch
          %601 = sbr.rel (%p599) target = $region76
        $region75: #{tpu_custom_call.1} parent=27 // pred_region
          %p602 = scmp.lt.s32.totalorder %s25, 1
          %s603 = scalar_select %p602, %s25, 1
          %s604 = smul.addr %s603, 16
          %s605 = smul.addr %s604, 4
          %s606 = scalar_lea.vmem %s14, %s605
        $region76: #{tpu_custom_call.1} parent=27 // pred_fallthru
          _
        // Predicated region
        $region77: #{tpu_custom_call.1} parent=27 // pred_check
          %p607 = pneg %p420
        $region78: #{tpu_custom_call.1} parent=27 // pred_check_branch
          %609 = sbr.rel (%p607) target = $region80
        $region79: #{tpu_custom_call.1} parent=27 // pred_region
          %p610 = scmp.lt.s32.totalorder %s25, 1
          %s611 = scalar_select %p610, %s25, 1
          %s612 = scalar_lea.vmem %s15, %s611
        $region80: #{tpu_custom_call.1} parent=27 // pred_fallthru
          _
        // Predicated region
        $region81: #{tpu_custom_call.1} parent=27 // pred_check
          %p613 = pneg %p446
        $region82: #{tpu_custom_call.1} parent=27 // pred_check_branch
          %615 = sbr.rel (%p613) target = $region84
        $region83: #{tpu_custom_call.1} parent=27 // pred_region
          %p616 = scmp.lt.s32.totalorder %s25, 1
          %s617 = scalar_select %p616, %s25, 1
          %s618 = scalar_lea.vmem %s16, %s617
        $region84: #{tpu_custom_call.1} parent=27 // pred_fallthru
          _
        // Predicated region
        $region85: #{tpu_custom_call.1} parent=27 // pred_check
          %p619 = pneg %p472
        $region86: #{tpu_custom_call.1} parent=27 // pred_check_branch
          %621 = sbr.rel (%p619) target = $region88
        $region87: #{tpu_custom_call.1} parent=27 // pred_region
          %p622 = scmp.lt.s32.totalorder %s25, 1
          %s623 = scalar_select %p622, %s25, 1
          %s624 = scalar_lea.vmem %s17, %s623
        $region88: #{tpu_custom_call.1} parent=27 // pred_fallthru
          _
      $region28: #{tpu_custom_call.1} parent=5 // pred_fallthru
        _
      %p625 = scmp.le.s32.totalorder 1, %s25
      %p626 = scmp.lt.s32.totalorder %s25, 3
      %p627 = pnand %p625, %p626
      %p628 = pneg %p627
      // Predicated region
      $region89: #{tpu_custom_call.1} parent=5 // pred_check
        _
      $region90: #{tpu_custom_call.1} parent=5 // pred_check_branch
        %630 = sbr.rel (%p627) target = $region92
      $region91: #{tpu_custom_call.1} parent=5 // pred_region
        %s631 = ssub.s32 %s25, 1
        %p632 = pneg %p46
        %p633 = pneg %p43
        %p634 = pneg %p67
        %p635 = pneg %p64
        %p636 = pneg %p88
        %p637 = pneg %p85
        %p638 = scmp.lt.s32.totalorder %s30, 1
        %s639 = scalar_select %p638, %s30, 1
        %s640 = scalar_lea.vmem %s3, %s639
        %p641 = pneg %p114
        %p642 = pneg %p111
        %p643 = scmp.lt.s32.totalorder %s30, 1
        %s644 = scalar_select %p643, %s30, 1
        %s645 = scalar_lea.vmem %s4, %s644
        %p646 = pneg %p140
        %p647 = pneg %p137
        %p648 = scmp.lt.s32.totalorder %s30, 1
        %s649 = scalar_select %p648, %s30, 1
        %s650 = scalar_lea.vmem %s5, %s649
        %p651 = pneg %p166
        %p652 = pneg %p163
        %p653 = scmp.lt.s32.totalorder %s30, 1
        %s654 = scalar_select %p653, %s30, 1
        %s655 = smul.addr %s654, 4
        %s656 = smul.addr %s655, 4
        %s657 = scalar_lea.vmem %s6, %s656
        %p658 = pneg %p192
        %p659 = pneg %p189
        %p660 = scmp.lt.s32.totalorder %s30, 1
        %s661 = scalar_select %p660, %s30, 1
        %s662 = scalar_lea.vmem %s7, %s661
        %p663 = pneg %p218
        %p664 = pneg %p215
        %p665 = scmp.lt.s32.totalorder %s30, 1
        %s666 = scalar_select %p665, %s30, 1
        %s667 = smul.addr %s666, 4
        %s668 = smul.addr %s667, 4
        %s669 = scalar_lea.vmem %s8, %s668
        %p670 = pneg %p244
        %p671 = pneg %p241
        %p672 = scmp.lt.s32.totalorder %s30, 1
        %s673 = scalar_select %p672, %s30, 1
        %s674 = scalar_lea.vmem %s9, %s673
        %p675 = pneg %p270
        %p676 = pneg %p267
        %p677 = scmp.lt.s32.totalorder %s30, 1
        %s678 = scalar_select %p677, %s30, 1
        %s679 = scalar_lea.vmem %s10, %s678
        %p680 = pneg %p296
        %p681 = pneg %p293
        %p682 = scmp.lt.s32.totalorder %s30, 1
        %s683 = scalar_select %p682, %s30, 1
        %s684 = scalar_lea.vmem %s11, %s683
        %p685 = pneg %p322
        %p686 = pneg %p319
        %p687 = scmp.lt.s32.totalorder %s30, 1
        %s688 = scalar_select %p687, %s30, 1
        %s689 = smul.addr %s688, 4
        %s690 = smul.addr %s689, 4
        %s691 = scalar_lea.vmem %s12, %s690
        %p692 = pneg %p348
        %p693 = pneg %p345
        %p694 = scmp.lt.s32.totalorder %s30, 1
        %s695 = scalar_select %p694, %s30, 1
        %s696 = scalar_lea.vmem %s13, %s695
        %p697 = pneg %p374
        %p698 = pneg %p371
        %p699 = scmp.lt.s32.totalorder %s30, 1
        %s700 = scalar_select %p699, %s30, 1
        %s701 = smul.addr %s700, 16
        %s702 = smul.addr %s701, 4
        %s703 = scalar_lea.vmem %s14, %s702
        %p704 = pneg %p400
        %p705 = pneg %p397
        %p706 = scmp.lt.s32.totalorder %s30, 1
        %s707 = scalar_select %p706, %s30, 1
        %s708 = scalar_lea.vmem %s15, %s707
        %p709 = pneg %p426
        %p710 = pneg %p423
        %p711 = scmp.lt.s32.totalorder %s30, 1
        %s712 = scalar_select %p711, %s30, 1
        %s713 = scalar_lea.vmem %s16, %s712
        %p714 = pneg %p452
        %p715 = pneg %p449
        %p716 = scmp.lt.s32.totalorder %s30, 1
        %s717 = scalar_select %p716, %s30, 1
        %s718 = scalar_lea.vmem %s17, %s717
        %p719 = pneg %p478
        %p720 = pneg %p475
        %p721 = pneg %p499
        %p722 = pneg %p496
        %p723 = scmp.lt.s32.totalorder %s30, 1
        %s724 = scalar_select %p723, %s30, 1
        %s725 = scalar_lea.vmem %s3, %s724
        %p726 = scmp.lt.s32.totalorder %s30, 1
        %s727 = scalar_select %p726, %s30, 1
        %s728 = scalar_lea.vmem %s4, %s727
        %p729 = scmp.lt.s32.totalorder %s30, 1
        %s730 = scalar_select %p729, %s30, 1
        %s731 = scalar_lea.vmem %s5, %s730
        %p732 = scmp.lt.s32.totalorder %s30, 1
        %s733 = scalar_select %p732, %s30, 1
        %s734 = smul.addr %s733, 4
        %s735 = smul.addr %s734, 4
        %s736 = scalar_lea.vmem %s6, %s735
        %p737 = scmp.lt.s32.totalorder %s30, 1
        %s738 = scalar_select %p737, %s30, 1
        %s739 = scalar_lea.vmem %s7, %s738
        %p740 = scmp.lt.s32.totalorder %s30, 1
        %s741 = scalar_select %p740, %s30, 1
        %s742 = smul.addr %s741, 4
        %s743 = smul.addr %s742, 4
        %s744 = scalar_lea.vmem %s8, %s743
        %p745 = scmp.lt.s32.totalorder %s30, 1
        %s746 = scalar_select %p745, %s30, 1
        %s747 = scalar_lea.vmem %s9, %s746
        %p748 = scmp.lt.s32.totalorder %s30, 1
        %s749 = scalar_select %p748, %s30, 1
        %s750 = scalar_lea.vmem %s10, %s749
        %p751 = scmp.lt.s32.totalorder %s30, 1
        %s752 = scalar_select %p751, %s30, 1
        %s753 = scalar_lea.vmem %s11, %s752
        %p754 = scmp.lt.s32.totalorder %s30, 1
        %s755 = scalar_select %p754, %s30, 1
        %s756 = smul.addr %s755, 4
        %s757 = smul.addr %s756, 4
        %s758 = scalar_lea.vmem %s12, %s757
        %p759 = scmp.lt.s32.totalorder %s30, 1
        %s760 = scalar_select %p759, %s30, 1
        %s761 = scalar_lea.vmem %s13, %s760
        %p762 = scmp.lt.s32.totalorder %s30, 1
        %s763 = scalar_select %p762, %s30, 1
        %s764 = smul.addr %s763, 16
        %s765 = smul.addr %s764, 4
        %s766 = scalar_lea.vmem %s14, %s765
        %p767 = scmp.lt.s32.totalorder %s30, 1
        %s768 = scalar_select %p767, %s30, 1
        %s769 = scalar_lea.vmem %s15, %s768
        %p770 = scmp.lt.s32.totalorder %s30, 1
        %s771 = scalar_select %p770, %s30, 1
        %s772 = scalar_lea.vmem %s16, %s771
        %p773 = scmp.lt.s32.totalorder %s30, 1
        %s774 = scalar_select %p773, %s30, 1
        %s775 = scalar_lea.vmem %s17, %s774
        %p777 = scmp.eq.s32.totalorder %s30, 0
        // Predicated region
        $region93: #{tpu_custom_call.1} parent=91 // pred_check
          %p778 = pneg %p777
        $region94: #{tpu_custom_call.1} parent=91 // pred_check_branch
          %780 = sbr.rel (%p778) target = $region96
        $region95: #{tpu_custom_call.1} parent=91 // pred_region
          %v781 = vld [vmem:[%s0] sm:$0xff]
          %v782 = vld [vmem:[%s0 + $0x8] sm:$0xff]
          %vm783 = vcmask 261120
          %784 = vst.msk [vmem:[#allocation2] sm:$0xff] %vm783, %v781
          %785 = vst.msk [vmem:[#allocation2 + $0x8] sm:$0xff] %vm783, %v782
        $region96: #{tpu_custom_call.1} parent=91 // pred_fallthru
          _
        %v786 = vld [vmem:[#allocation2] sm:$0xff]
        %v787 = vld [vmem:[#allocation2 + $0x8] sm:$0xff]
        %v788 = vpack.c.bf16 %v787, %v786
        %v789 = vld [vmem:[%s2] sm:$0xff]
        %vm790 = vcmask 64512
        %v792 = vsel %vm790, %v789, 0
        %794 = vmatprep.subr.mxu0 0.0
        %795 = vmatpush1.msra.mxu0 %v786
        %796 = vmatprep.subr.mxu0 0.0
        %797 = vmatpush1.msra.mxu0 0.0
        %798 = vmatprep.subr.mxu0 0.0
        %799 = vmatpush1.msra.mxu0 0.0
        %800 = vmatprep.subr.mxu0 0.0
        %801 = vmatpush1.msra.mxu0 0.0
        %802 = vmatprep.subr.mxu0 0.0
        %803 = vmatpush1.msra.mxu0 0.0
        %804 = vmatprep.subr.mxu0 0.0
        %805 = vmatpush1.msra.mxu0 0.0
        %806 = vmatprep.subr.mxu0 0.0
        %807 = vmatpush1.msra.mxu0 0.0
        %808 = vmatprep.subr.mxu0 0.0
        %809 = vmatpush1.msra.mxu0 0.0
        %810 = vmatprep.subr.mxu0 0.0
        %811 = vmatpush1.msra.mxu0 0.0
        %812 = vmatprep.subr.mxu0 0.0
        %813 = vmatpush1.msra.mxu0 0.0
        %814 = vmatprep.subr.mxu0 0.0
        %815 = vmatpush1.msra.mxu0 0.0
        %816 = vmatprep.subr.mxu0 0.0
        %817 = vmatpush1.msra.mxu0 0.0
        %818 = vmatprep.subr.mxu0 0.0
        %819 = vmatpush1.msra.mxu0 0.0
        %820 = vmatprep.subr.mxu0 0.0
        %821 = vmatpush1.msra.mxu0 0.0
        %822 = vmatprep.subr.mxu0 0.0
        %823 = vmatpush1.msra.mxu0 0.0
        %824 = vmatprep.subr.mxu0 0.0
        %825 = vmatpush1.msra.mxu0 0.0
        %826 = vmatprep.subr.mxu0 0.0
        %827 = vmatpush1.msra.mxu0 0.0
        %828 = vmatprep.subr.mxu0 0.0
        %829 = vmatpush1.msra.mxu0 0.0
        %830 = vmatprep.subr.mxu0 0.0
        %831 = vmatpush1.msra.mxu0 0.0
        %832 = vmatprep.subr.mxu0 0.0
        %833 = vmatpush1.msra.mxu0 0.0
        %834 = vmatprep.subr.mxu0 0.0
        %835 = vmatpush1.msra.mxu0 0.0
        %836 = vmatprep.subr.mxu0 0.0
        %837 = vmatpush1.msra.mxu0 0.0
        %838 = vmatprep.subr.mxu0 0.0
        %839 = vmatpush1.msra.mxu0 0.0
        %840 = vmatprep.subr.mxu0 0.0
        %841 = vmatpush1.msra.mxu0 0.0
        %842 = vmatprep.subr.mxu0 0.0
        %843 = vmatpush1.msra.mxu0 0.0
        %844 = vmatprep.subr.mxu0 0.0
        %845 = vmatpush1.msra.mxu0 0.0
        %846 = vmatprep.subr.mxu0 0.0
        %847 = vmatpush1.msra.mxu0 0.0
        %848 = vmatprep.subr.mxu0 0.0
        %849 = vmatpush1.msra.mxu0 0.0
        %850 = vmatprep.subr.mxu0 0.0
        %851 = vmatpush1.msra.mxu0 0.0
        %852 = vmatprep.subr.mxu0 0.0
        %853 = vmatpush1.msra.mxu0 0.0
        %854 = vmatprep.subr.mxu0 0.0
        %855 = vmatpush1.msra.mxu0 0.0
        %856 = vmatprep.subr.mxu0 0.0
        %857 = vmatpush1.msra.mxu0 0.0
        %858 = vmatprep.mubr.f32.mxu0 0.0
        %859 = vmatmul.mubr.f32.gmra.mrb[0].mxu0 %v792
        %v860 = vpop.f32.mrb[0].mxu0
        %v861 = vadd.f32 0.0, %v860
        %v862 = vpop.f32.mrb[0].mxu0
        %863 = vdwg.mxu0
        %864 = vmatprep.subr.mxu0 0.0
        %865 = vmatpush1.msra.mxu0 %v787
        %866 = vmatprep.subr.mxu0 0.0
        %867 = vmatpush1.msra.mxu0 0.0
        %868 = vmatprep.subr.mxu0 0.0
        %869 = vmatpush1.msra.mxu0 0.0
        %870 = vmatprep.subr.mxu0 0.0
        %871 = vmatpush1.msra.mxu0 0.0
        %872 = vmatprep.subr.mxu0 0.0
        %873 = vmatpush1.msra.mxu0 0.0
        %874 = vmatprep.subr.mxu0 0.0
        %875 = vmatpush1.msra.mxu0 0.0
        %876 = vmatprep.subr.mxu0 0.0
        %877 = vmatpush1.msra.mxu0 0.0
        %878 = vmatprep.subr.mxu0 0.0
        %879 = vmatpush1.msra.mxu0 0.0
        %880 = vmatprep.subr.mxu0 0.0
        %881 = vmatpush1.msra.mxu0 0.0
        %882 = vmatprep.subr.mxu0 0.0
        %883 = vmatpush1.msra.mxu0 0.0
        %884 = vmatprep.subr.mxu0 0.0
        %885 = vmatpush1.msra.mxu0 0.0
        %886 = vmatprep.subr.mxu0 0.0
        %887 = vmatpush1.msra.mxu0 0.0
        %888 = vmatprep.subr.mxu0 0.0
        %889 = vmatpush1.msra.mxu0 0.0
        %890 = vmatprep.subr.mxu0 0.0
        %891 = vmatpush1.msra.mxu0 0.0
        %892 = vmatprep.subr.mxu0 0.0
        %893 = vmatpush1.msra.mxu0 0.0
        %894 = vmatprep.subr.mxu0 0.0
        %895 = vmatpush1.msra.mxu0 0.0
        %896 = vmatprep.subr.mxu0 0.0
        %897 = vmatpush1.msra.mxu0 0.0
        %898 = vmatprep.subr.mxu0 0.0
        %899 = vmatpush1.msra.mxu0 0.0
        %900 = vmatprep.subr.mxu0 0.0
        %901 = vmatpush1.msra.mxu0 0.0
        %902 = vmatprep.subr.mxu0 0.0
        %903 = vmatpush1.msra.mxu0 0.0
        %904 = vmatprep.subr.mxu0 0.0
        %905 = vmatpush1.msra.mxu0 0.0
        %906 = vmatprep.subr.mxu0 0.0
        %907 = vmatpush1.msra.mxu0 0.0
        %908 = vmatprep.subr.mxu0 0.0
        %909 = vmatpush1.msra.mxu0 0.0
        %910 = vmatprep.subr.mxu0 0.0
        %911 = vmatpush1.msra.mxu0 0.0
        %912 = vmatprep.subr.mxu0 0.0
        %913 = vmatpush1.msra.mxu0 0.0
        %914 = vmatprep.subr.mxu0 0.0
        %915 = vmatpush1.msra.mxu0 0.0
        %916 = vmatprep.subr.mxu0 0.0
        %917 = vmatpush1.msra.mxu0 0.0
        %918 = vmatprep.subr.mxu0 0.0
        %919 = vmatpush1.msra.mxu0 0.0
        %920 = vmatprep.subr.mxu0 0.0
        %921 = vmatpush1.msra.mxu0 0.0
        %922 = vmatprep.subr.mxu0 0.0
        %923 = vmatpush1.msra.mxu0 0.0
        %924 = vmatprep.subr.mxu0 0.0
        %925 = vmatpush1.msra.mxu0 0.0
        %926 = vmatprep.subr.mxu0 0.0
        %927 = vmatpush1.msra.mxu0 0.0
        %928 = vmatprep.mubr.f32.mxu0 0.0
        %929 = vmatmul.mubr.f32.gmra.mrb[0].mxu0 %v792
        %v930 = vpop.f32.mrb[0].mxu0
        %v931 = vadd.f32 0.0, %v930
        %v932 = vpop.f32.mrb[0].mxu0
        %933 = vdwg.mxu0
        %v934 = vsub.f32 %v786, %v861
        %v935 = vsub.f32 %v787, %v931
        %v936 = vld [vmem:[%s725] sm:$0x1]
        %v938 = vlaneseq
        %v939 = vshrl.u32 %v938, 7
        %v940 = vsub.s32 0, %v939
        %v941 = vrot.slane %v936, %v940
        %v943 = vmul.f32 %v941, %v934
        %v944 = vmul.f32 %v941, %v935
        %v945 = vadd.f32 %v861, %v943
        %v946 = vadd.f32 %v931, %v944
        %v947 = vadd.f32 %v945, %v786
        %v948 = vadd.f32 %v946, %v787
        %vm949 = vcmask 261120
        %v950 = vsel %vm949, %v947, 0.0
        %951 = vadd.xlane.f32.xlu0 %v950
        %v952 = vpop.xlane.xlu0 %951
        %v953 = vsel %vm949, %v948, 0.0
        %954 = vadd.xlane.f32.xlu0 %v953
        %v955 = vpop.xlane.xlu0 %954
        %v956 = vrcp.pop 32.0
        %v957 = vmul.f32 %v952, %v956
        %v958 = vmul.f32 %v955, %v956
        %v959 = vsub.f32 %v947, %v957
        %v960 = vsub.f32 %v948, %v958
        %v961 = vmul.f32 %v959, %v959
        %v962 = vmul.f32 %v960, %v960
        %v963 = vsel %vm949, %v961, 0.0
        %964 = vadd.xlane.f32.xlu0 %v963
        %v965 = vpop.xlane.xlu0 %964
        %v966 = vsel %vm949, %v962, 0.0
        %967 = vadd.xlane.f32.xlu0 %v966
        %v968 = vpop.xlane.xlu0 %967
        %v969 = vmul.f32 %v965, %v956
        %v970 = vmul.f32 %v968, %v956
        %v971 = vadd.f32 %v969, 1e-12
        %v972 = vadd.f32 %v970, 1e-12
        %v973 = vrsqrt.pop %v971
        %v974 = vrsqrt.pop %v972
        %v975 = vmul.f32 %v959, %v973
        %v976 = vmul.f32 %v960, %v974
        %v977 = vld [vmem:[%s728] sm:$0x1]
        %v979 = vlaneseq
        %v980 = vshrl.u32 %v979, 7
        %v981 = vsub.s32 0, %v980
        %v982 = vrot.slane %v977, %v981
        %v984 = vmul.f32 %v975, %v982
        %v985 = vmul.f32 %v976, %v982
        %v986 = vld [vmem:[%s731] sm:$0x1]
        %v988 = vlaneseq
        %v989 = vshrl.u32 %v988, 7
        %v990 = vsub.s32 0, %v989
        %v991 = vrot.slane %v986, %v990
        %v993 = vadd.f32 %v984, %v991
        %v994 = vadd.f32 %v985, %v991
        %v995 = vld [vmem:[%s736] sm:$0xf]
        %v996 = vld [vmem:[%s736 + $0x4] sm:$0xf]
        %v997 = vld [vmem:[%s736 + $0x8] sm:$0xf]
        %v998 = vld [vmem:[%s736 + $0xc] sm:$0xf]
        %v999 = vld [vmem:[%s739] sm:$0x1]
        %v1001 = vlaneseq
        %v1002 = vshrl.u32 %v1001, 7
        %v1003 = vsub.s32 0, %v1002
        %v1004 = vrot.slane %v999, %v1003
        %v1010 = vunpack.c.l.b16 %v995
        %v1011 = vunpack.c.l.b16 %v996
        %v1012 = vunpack.c.l.b16 %v997
        %v1013 = vunpack.c.l.b16 %v998
        %v1014 = vpack.c.b16 %v1011, %v1010
        %v1015 = vpack.c.b16 %v1013, %v1012
        %v1019 = vsel %vm949, %v788, 0
        %1021 = vmatprep.subr.bf16.mxu0 0
        %1022 = vmatpush1.bf16.msra.mxu0 %v1014
        %1023 = vmatprep.subr.bf16.mxu0 0
        %1024 = vmatpush1.bf16.msra.mxu0 %v1015
        %1025 = vmatprep.subr.bf16.mxu0 0
        %1026 = vmatpush1.bf16.msra.mxu0 0
        %1027 = vmatprep.subr.bf16.mxu0 0
        %1028 = vmatpush1.bf16.msra.mxu0 0
        %1029 = vmatprep.subr.bf16.mxu0 0
        %1030 = vmatpush1.bf16.msra.mxu0 0
        %1031 = vmatprep.subr.bf16.mxu0 0
        %1032 = vmatpush1.bf16.msra.mxu0 0
        %1033 = vmatprep.subr.bf16.mxu0 0
        %1034 = vmatpush1.bf16.msra.mxu0 0
        %1035 = vmatprep.subr.bf16.mxu0 0
        %1036 = vmatpush1.bf16.msra.mxu0 0
        %1037 = vmatprep.subr.bf16.mxu0 0
        %1038 = vmatpush1.bf16.msra.mxu0 0
        %1039 = vmatprep.subr.bf16.mxu0 0
        %1040 = vmatpush1.bf16.msra.mxu0 0
        %1041 = vmatprep.subr.bf16.mxu0 0
        %1042 = vmatpush1.bf16.msra.mxu0 0
        %1043 = vmatprep.subr.bf16.mxu0 0
        %1044 = vmatpush1.bf16.msra.mxu0 0
        %1045 = vmatprep.subr.bf16.mxu0 0
        %1046 = vmatpush1.bf16.msra.mxu0 0
        %1047 = vmatprep.subr.bf16.mxu0 0
        %1048 = vmatpush1.bf16.msra.mxu0 0
        %1049 = vmatprep.subr.bf16.mxu0 0
        %1050 = vmatpush1.bf16.msra.mxu0 0
        %1051 = vmatprep.subr.bf16.mxu0 0
        %1052 = vmatpush1.bf16.msra.mxu0 0
        %1053 = vmatprep.mubr.bf16.mxu0 0
        %1054 = vmatmul.mubr.bf16.gmra.mrb[0].mxu0 %v1019
        %v1055 = vpop.f32.mrb[0].mxu0
        %v1056 = vadd.f32 %v1004, %v1055
        %v1057 = vpop.f32.mrb[0].mxu0
        %v1058 = vpop.f32.mrb[0].mxu0
        %v1059 = vadd.f32 %v1004, %v1058
        %v1060 = vpop.f32.mrb[0].mxu0
        %1061 = vdwg.mxu0
        %v1062 = vpack.c.bf16 %v1059, %v1056
        %v1063 = vld [vmem:[%s1] sm:$0xff]
        %v1064 = vld [vmem:[%s1 + $0x8] sm:$0xff]
        %v1066 = vunpack.c.l.b16 %v1062
        %v1067 = vunpack.c.h.b16 %v1062
        %v1068 = vpack.c.b16 %v1066, %v1066
        %v1069 = vpack.c.b16 %v1067, %v1067
        %1070 = vrot.lane.b32.xlu0 %v1068, 96
        %v1071 = vpop.permute.xlu0 %1070
        %vm1072 = vcmask 130048
        %v1074 = vsel %vm1072, %v1068, 0
        %v1077 = vsel %vm1072, %v1071, 0
        %1079 = vmatprep.subr.bf16.mxu0 0
        %1080 = vmatpush1.bf16.xpose.msra.mxu0 %v1077
        %1081 = vmatprep.subr.bf16.mxu0 0
        %1082 = vmatpush1.bf16.xpose.msra.mxu0 0
        %1083 = vmatprep.subr.bf16.mxu0 0
        %1084 = vmatpush1.bf16.xpose.msra.mxu0 0
        %1085 = vmatprep.subr.bf16.mxu0 0
        %1086 = vmatpush1.bf16.xpose.msra.mxu0 0
        %1087 = vmatprep.subr.bf16.mxu0 0
        %1088 = vmatpush1.bf16.xpose.msra.mxu0 0
        %1089 = vmatprep.subr.bf16.mxu0 0
        %1090 = vmatpush1.bf16.xpose.msra.mxu0 0
        %1091 = vmatprep.subr.bf16.mxu0 0
        %1092 = vmatpush1.bf16.xpose.msra.mxu0 0
        %1093 = vmatprep.subr.bf16.mxu0 0
        %1094 = vmatpush1.bf16.xpose.msra.mxu0 0
        %1095 = vmatprep.subr.bf16.mxu0 0
        %1096 = vmatpush1.bf16.xpose.msra.mxu0 0
        %1097 = vmatprep.subr.bf16.mxu0 0
        %1098 = vmatpush1.bf16.xpose.msra.mxu0 0
        %1099 = vmatprep.subr.bf16.mxu0 0
        %1100 = vmatpush1.bf16.xpose.msra.mxu0 0
        %1101 = vmatprep.subr.bf16.mxu0 0
        %1102 = vmatpush1.bf16.xpose.msra.mxu0 0
        %1103 = vmatprep.subr.bf16.mxu0 0
        %1104 = vmatpush1.bf16.xpose.msra.mxu0 0
        %1105 = vmatprep.subr.bf16.mxu0 0
        %1106 = vmatpush1.bf16.xpose.msra.mxu0 0
        %1107 = vmatprep.subr.bf16.mxu0 0
        %1108 = vmatpush1.bf16.xpose.msra.mxu0 0
        %1109 = vmatprep.subr.bf16.mxu0 0
        %1110 = vmatpush1.bf16.xpose.msra.mxu0 0
        %1111 = vmatprep.mubr.bf16.mxu0 0
        %1112 = vmatmul.mubr.bf16.gmra.mrb[0].mxu0 %v1074
        %v1113 = vpop.f32.mrb[0].mxu0
        %v1114 = vadd.f32 %v1063, %v1113
        %v1115 = vpop.f32.mrb[0].mxu0
        %v1116 = vpop.f32.mrb[0].mxu0
        %v1117 = vpop.f32.mrb[0].mxu0
        %1118 = vdwg.mxu0
        %1119 = vrot.lane.b32.xlu0 %v1069, 96
        %v1120 = vpop.permute.xlu0 %1119
        %v1122 = vsel %vm1072, %v1069, 0
        %v1125 = vsel %vm1072, %v1120, 0
        %1127 = vmatprep.subr.bf16.mxu0 0
        %1128 = vmatpush1.bf16.xpose.msra.mxu0 %v1125
        %1129 = vmatprep.subr.bf16.mxu0 0
        %1130 = vmatpush1.bf16.xpose.msra.mxu0 0
        %1131 = vmatprep.subr.bf16.mxu0 0
        %1132 = vmatpush1.bf16.xpose.msra.mxu0 0
        %1133 = vmatprep.subr.bf16.mxu0 0
        %1134 = vmatpush1.bf16.xpose.msra.mxu0 0
        %1135 = vmatprep.subr.bf16.mxu0 0
        %1136 = vmatpush1.bf16.xpose.msra.mxu0 0
        %1137 = vmatprep.subr.bf16.mxu0 0
        %1138 = vmatpush1.bf16.xpose.msra.mxu0 0
        %1139 = vmatprep.subr.bf16.mxu0 0
        %1140 = vmatpush1.bf16.xpose.msra.mxu0 0
        %1141 = vmatprep.subr.bf16.mxu0 0
        %1142 = vmatpush1.bf16.xpose.msra.mxu0 0
        %1143 = vmatprep.subr.bf16.mxu0 0
        %1144 = vmatpush1.bf16.xpose.msra.mxu0 0
        %1145 = vmatprep.subr.bf16.mxu0 0
        %1146 = vmatpush1.bf16.xpose.msra.mxu0 0
        %1147 = vmatprep.subr.bf16.mxu0 0
        %1148 = vmatpush1.bf16.xpose.msra.mxu0 0
        %1149 = vmatprep.subr.bf16.mxu0 0
        %1150 = vmatpush1.bf16.xpose.msra.mxu0 0
        %1151 = vmatprep.subr.bf16.mxu0 0
        %1152 = vmatpush1.bf16.xpose.msra.mxu0 0
        %1153 = vmatprep.subr.bf16.mxu0 0
        %1154 = vmatpush1.bf16.xpose.msra.mxu0 0
        %1155 = vmatprep.subr.bf16.mxu0 0
        %1156 = vmatpush1.bf16.xpose.msra.mxu0 0
        %1157 = vmatprep.subr.bf16.mxu0 0
        %1158 = vmatpush1.bf16.xpose.msra.mxu0 0
        %1159 = vmatprep.mubr.bf16.mxu0 0
        %1160 = vmatmul.mubr.bf16.gmra.mrb[0].mxu0 %v1122
        %v1161 = vpop.f32.mrb[0].mxu0
        %v1162 = vadd.f32 %v1064, %v1161
        %v1163 = vpop.f32.mrb[0].mxu0
        %v1164 = vpop.f32.mrb[0].mxu0
        %v1165 = vpop.f32.mrb[0].mxu0
        %1166 = vdwg.mxu0
        %v1167 = vsel %vm790, %v1114, -inf
        %1168 = vmax.xlane.f32.xlu0 %v1167
        %v1169 = vpop.xlane.xlu0 %1168
        %v1170 = vsel %vm790, %v1162, -inf
        %1171 = vmax.xlane.f32.xlu0 %v1170
        %v1172 = vpop.xlane.xlu0 %1171
        %v1173 = vsub.f32 %v1114, %v1169
        %v1174 = vsub.f32 %v1162, %v1172
        %v1175 = vmul.f32 %v1173, 1.442695
        %v1176 = vpow.pop %v1175
        %v1177 = vmul.f32 %v1174, 1.442695
        %v1178 = vpow.pop %v1177
        %v1179 = vsel %vm790, %v1176, 0.0
        %1180 = vadd.xlane.f32.xlu0 %v1179
        %v1181 = vpop.xlane.xlu0 %1180
        %v1182 = vsel %vm790, %v1178, 0.0
        %1183 = vadd.xlane.f32.xlu0 %v1182
        %v1184 = vpop.xlane.xlu0 %1183
        %v1185 = vrcp.pop %v1181
        %v1186 = vmul.f32 %v1176, %v1185
        %v1187 = vrcp.pop %v1184
        %v1188 = vmul.f32 %v1178, %v1187
        %v1189 = vpack.c.bf16 %v1186, %v1186
        %v1190 = vpack.c.bf16 %v1188, %v1188
        %1191 = vrot.lane.b32.xlu0 %v1068, 64
        %v1192 = vpop.permute.xlu0 %1191
        %v1194 = vsel %vm790, %v1189, 0
        %vm1196 = vcmask 1043456
        %v1198 = vsel %vm1196, %v1192, 0
        %1200 = vmatprep.subr.bf16.mxu0 0
        %1201 = vmatpush1.bf16.msra.mxu0 %v1198
        %1202 = vmatprep.subr.bf16.mxu0 0
        %1203 = vmatpush1.bf16.msra.mxu0 0
        %1204 = vmatprep.subr.bf16.mxu0 0
        %1205 = vmatpush1.bf16.msra.mxu0 0
        %1206 = vmatprep.subr.bf16.mxu0 0
        %1207 = vmatpush1.bf16.msra.mxu0 0
        %1208 = vmatprep.subr.bf16.mxu0 0
        %1209 = vmatpush1.bf16.msra.mxu0 0
        %1210 = vmatprep.subr.bf16.mxu0 0
        %1211 = vmatpush1.bf16.msra.mxu0 0
        %1212 = vmatprep.subr.bf16.mxu0 0
        %1213 = vmatpush1.bf16.msra.mxu0 0
        %1214 = vmatprep.subr.bf16.mxu0 0
        %1215 = vmatpush1.bf16.msra.mxu0 0
        %1216 = vmatprep.subr.bf16.mxu0 0
        %1217 = vmatpush1.bf16.msra.mxu0 0
        %1218 = vmatprep.subr.bf16.mxu0 0
        %1219 = vmatpush1.bf16.msra.mxu0 0
        %1220 = vmatprep.subr.bf16.mxu0 0
        %1221 = vmatpush1.bf16.msra.mxu0 0
        %1222 = vmatprep.subr.bf16.mxu0 0
        %1223 = vmatpush1.bf16.msra.mxu0 0
        %1224 = vmatprep.subr.bf16.mxu0 0
        %1225 = vmatpush1.bf16.msra.mxu0 0
        %1226 = vmatprep.subr.bf16.mxu0 0
        %1227 = vmatpush1.bf16.msra.mxu0 0
        %1228 = vmatprep.subr.bf16.mxu0 0
        %1229 = vmatpush1.bf16.msra.mxu0 0
        %1230 = vmatprep.subr.bf16.mxu0 0
        %1231 = vmatpush1.bf16.msra.mxu0 0
        %1232 = vmatprep.mubr.bf16.mxu0 0
        %1233 = vmatmul.mubr.bf16.gmra.mrb[0].mxu0 %v1194
        %v1234 = vpop.f32.mrb[0].mxu0
        %v1235 = vadd.f32 0.0, %v1234
        %v1236 = vpop.f32.mrb[0].mxu0
        %v1237 = vpop.f32.mrb[0].mxu0
        %v1238 = vpop.f32.mrb[0].mxu0
        %1239 = vdwg.mxu0
        %1240 = vrot.lane.b32.xlu0 %v1069, 64
        %v1241 = vpop.permute.xlu0 %1240
        %v1243 = vsel %vm790, %v1190, 0
        %v1246 = vsel %vm1196, %v1241, 0
        %1248 = vmatprep.subr.bf16.mxu0 0
        %1249 = vmatpush1.bf16.msra.mxu0 %v1246
        %1250 = vmatprep.subr.bf16.mxu0 0
        %1251 = vmatpush1.bf16.msra.mxu0 0
        %1252 = vmatprep.subr.bf16.mxu0 0
        %1253 = vmatpush1.bf16.msra.mxu0 0
        %1254 = vmatprep.subr.bf16.mxu0 0
        %1255 = vmatpush1.bf16.msra.mxu0 0
        %1256 = vmatprep.subr.bf16.mxu0 0
        %1257 = vmatpush1.bf16.msra.mxu0 0
        %1258 = vmatprep.subr.bf16.mxu0 0
        %1259 = vmatpush1.bf16.msra.mxu0 0
        %1260 = vmatprep.subr.bf16.mxu0 0
        %1261 = vmatpush1.bf16.msra.mxu0 0
        %1262 = vmatprep.subr.bf16.mxu0 0
        %1263 = vmatpush1.bf16.msra.mxu0 0
        %1264 = vmatprep.subr.bf16.mxu0 0
        %1265 = vmatpush1.bf16.msra.mxu0 0
        %1266 = vmatprep.subr.bf16.mxu0 0
        %1267 = vmatpush1.bf16.msra.mxu0 0
        %1268 = vmatprep.subr.bf16.mxu0 0
        %1269 = vmatpush1.bf16.msra.mxu0 0
        %1270 = vmatprep.subr.bf16.mxu0 0
        %1271 = vmatpush1.bf16.msra.mxu0 0
        %1272 = vmatprep.subr.bf16.mxu0 0
        %1273 = vmatpush1.bf16.msra.mxu0 0
        %1274 = vmatprep.subr.bf16.mxu0 0
        %1275 = vmatpush1.bf16.msra.mxu0 0
        %1276 = vmatprep.subr.bf16.mxu0 0
        %1277 = vmatpush1.bf16.msra.mxu0 0
        %1278 = vmatprep.subr.bf16.mxu0 0
        %1279 = vmatpush1.bf16.msra.mxu0 0
        %1280 = vmatprep.mubr.bf16.mxu0 0
        %1281 = vmatmul.mubr.bf16.gmra.mrb[0].mxu0 %v1243
        %v1282 = vpop.f32.mrb[0].mxu0
        %v1283 = vadd.f32 0.0, %v1282
        %v1284 = vpop.f32.mrb[0].mxu0
        %v1285 = vpop.f32.mrb[0].mxu0
        %v1286 = vpop.f32.mrb[0].mxu0
        %1287 = vdwg.mxu0
        %1288 = vrot.lane.b32.xlu0 %v1068, 112
        %v1289 = vpop.permute.xlu0 %1288
        %1290 = vrot.lane.b32.xlu0 %v1068, 80
        %v1291 = vpop.permute.xlu0 %1290
        %v1293 = vsel %vm1072, %v1289, 0
        %v1296 = vsel %vm1072, %v1291, 0
        %1298 = vmatprep.subr.bf16.mxu0 0
        %1299 = vmatpush1.bf16.xpose.msra.mxu0 %v1296
        %1300 = vmatprep.subr.bf16.mxu0 0
        %1301 = vmatpush1.bf16.xpose.msra.mxu0 0
        %1302 = vmatprep.subr.bf16.mxu0 0
        %1303 = vmatpush1.bf16.xpose.msra.mxu0 0
        %1304 = vmatprep.subr.bf16.mxu0 0
        %1305 = vmatpush1.bf16.xpose.msra.mxu0 0
        %1306 = vmatprep.subr.bf16.mxu0 0
        %1307 = vmatpush1.bf16.xpose.msra.mxu0 0
        %1308 = vmatprep.subr.bf16.mxu0 0
        %1309 = vmatpush1.bf16.xpose.msra.mxu0 0
        %1310 = vmatprep.subr.bf16.mxu0 0
        %1311 = vmatpush1.bf16.xpose.msra.mxu0 0
        %1312 = vmatprep.subr.bf16.mxu0 0
        %1313 = vmatpush1.bf16.xpose.msra.mxu0 0
        %1314 = vmatprep.subr.bf16.mxu0 0
        %1315 = vmatpush1.bf16.xpose.msra.mxu0 0
        %1316 = vmatprep.subr.bf16.mxu0 0
        %1317 = vmatpush1.bf16.xpose.msra.mxu0 0
        %1318 = vmatprep.subr.bf16.mxu0 0
        %1319 = vmatpush1.bf16.xpose.msra.mxu0 0
        %1320 = vmatprep.subr.bf16.mxu0 0
        %1321 = vmatpush1.bf16.xpose.msra.mxu0 0
        %1322 = vmatprep.subr.bf16.mxu0 0
        %1323 = vmatpush1.bf16.xpose.msra.mxu0 0
        %1324 = vmatprep.subr.bf16.mxu0 0
        %1325 = vmatpush1.bf16.xpose.msra.mxu0 0
        %1326 = vmatprep.subr.bf16.mxu0 0
        %1327 = vmatpush1.bf16.xpose.msra.mxu0 0
        %1328 = vmatprep.subr.bf16.mxu0 0
        %1329 = vmatpush1.bf16.xpose.msra.mxu0 0
        %1330 = vmatprep.mubr.bf16.mxu0 0
        %1331 = vmatmul.mubr.bf16.gmra.mrb[0].mxu0 %v1293
        %v1332 = vpop.f32.mrb[0].mxu0
        %v1333 = vadd.f32 %v1063, %v1332
        %v1334 = vpop.f32.mrb[0].mxu0
        %v1335 = vpop.f32.mrb[0].mxu0
        %v1336 = vpop.f32.mrb[0].mxu0
        %1337 = vdwg.mxu0
        %1338 = vrot.lane.b32.xlu0 %v1069, 112
        %v1339 = vpop.permute.xlu0 %1338
        %1340 = vrot.lane.b32.xlu0 %v1069, 80
        %v1341 = vpop.permute.xlu0 %1340
        %v1343 = vsel %vm1072, %v1339, 0
        %v1346 = vsel %vm1072, %v1341, 0
        %1348 = vmatprep.subr.bf16.mxu0 0
        %1349 = vmatpush1.bf16.xpose.msra.mxu0 %v1346
        %1350 = vmatprep.subr.bf16.mxu0 0
        %1351 = vmatpush1.bf16.xpose.msra.mxu0 0
        %1352 = vmatprep.subr.bf16.mxu0 0
        %1353 = vmatpush1.bf16.xpose.msra.mxu0 0
        %1354 = vmatprep.subr.bf16.mxu0 0
        %1355 = vmatpush1.bf16.xpose.msra.mxu0 0
        %1356 = vmatprep.subr.bf16.mxu0 0
        %1357 = vmatpush1.bf16.xpose.msra.mxu0 0
        %1358 = vmatprep.subr.bf16.mxu0 0
        %1359 = vmatpush1.bf16.xpose.msra.mxu0 0
        %1360 = vmatprep.subr.bf16.mxu0 0
        %1361 = vmatpush1.bf16.xpose.msra.mxu0 0
        %1362 = vmatprep.subr.bf16.mxu0 0
        %1363 = vmatpush1.bf16.xpose.msra.mxu0 0
        %1364 = vmatprep.subr.bf16.mxu0 0
        %1365 = vmatpush1.bf16.xpose.msra.mxu0 0
        %1366 = vmatprep.subr.bf16.mxu0 0
        %1367 = vmatpush1.bf16.xpose.msra.mxu0 0
        %1368 = vmatprep.subr.bf16.mxu0 0
        %1369 = vmatpush1.bf16.xpose.msra.mxu0 0
        %1370 = vmatprep.subr.bf16.mxu0 0
        %1371 = vmatpush1.bf16.xpose.msra.mxu0 0
        %1372 = vmatprep.subr.bf16.mxu0 0
        %1373 = vmatpush1.bf16.xpose.msra.mxu0 0
        %1374 = vmatprep.subr.bf16.mxu0 0
        %1375 = vmatpush1.bf16.xpose.msra.mxu0 0
        %1376 = vmatprep.subr.bf16.mxu0 0
        %1377 = vmatpush1.bf16.xpose.msra.mxu0 0
        %1378 = vmatprep.subr.bf16.mxu0 0
        %1379 = vmatpush1.bf16.xpose.msra.mxu0 0
        %1380 = vmatprep.mubr.bf16.mxu0 0
        %1381 = vmatmul.mubr.bf16.gmra.mrb[0].mxu0 %v1343
        %v1382 = vpop.f32.mrb[0].mxu0
        %v1383 = vadd.f32 %v1064, %v1382
        %v1384 = vpop.f32.mrb[0].mxu0
        %v1385 = vpop.f32.mrb[0].mxu0
        %v1386 = vpop.f32.mrb[0].mxu0
        %1387 = vdwg.mxu0
        %v1388 = vsel %vm790, %v1333, -inf
        %1389 = vmax.xlane.f32.xlu0 %v1388
        %v1390 = vpop.xlane.xlu0 %1389
        %v1391 = vsel %vm790, %v1383, -inf
        %1392 = vmax.xlane.f32.xlu0 %v1391
        %v1393 = vpop.xlane.xlu0 %1392
        %v1394 = vsub.f32 %v1333, %v1390
        %v1395 = vsub.f32 %v1383, %v1393
        %v1396 = vmul.f32 %v1394, 1.442695
        %v1397 = vpow.pop %v1396
        %v1398 = vmul.f32 %v1395, 1.442695
        %v1399 = vpow.pop %v1398
        %v1400 = vsel %vm790, %v1397, 0.0
        %1401 = vadd.xlane.f32.xlu0 %v1400
        %v1402 = vpop.xlane.xlu0 %1401
        %v1403 = vsel %vm790, %v1399, 0.0
        %1404 = vadd.xlane.f32.xlu0 %v1403
        %v1405 = vpop.xlane.xlu0 %1404
        %v1406 = vrcp.pop %v1402
        %v1407 = vmul.f32 %v1397, %v1406
        %v1408 = vrcp.pop %v1405
        %v1409 = vmul.f32 %v1399, %v1408
        %v1410 = vpack.c.bf16 %v1407, %v1407
        %v1411 = vpack.c.bf16 %v1409, %v1409
        %1412 = vrot.lane.b32.xlu0 %v1068, 48
        %v1413 = vpop.permute.xlu0 %1412
        %v1415 = vsel %vm790, %v1410, 0
        %v1418 = vsel %vm1196, %v1413, 0
        %1420 = vmatprep.subr.bf16.mxu0 0
        %1421 = vmatpush1.bf16.msra.mxu0 %v1418
        %1422 = vmatprep.subr.bf16.mxu0 0
        %1423 = vmatpush1.bf16.msra.mxu0 0
        %1424 = vmatprep.subr.bf16.mxu0 0
        %1425 = vmatpush1.bf16.msra.mxu0 0
        %1426 = vmatprep.subr.bf16.mxu0 0
        %1427 = vmatpush1.bf16.msra.mxu0 0
        %1428 = vmatprep.subr.bf16.mxu0 0
        %1429 = vmatpush1.bf16.msra.mxu0 0
        %1430 = vmatprep.subr.bf16.mxu0 0
        %1431 = vmatpush1.bf16.msra.mxu0 0
        %1432 = vmatprep.subr.bf16.mxu0 0
        %1433 = vmatpush1.bf16.msra.mxu0 0
        %1434 = vmatprep.subr.bf16.mxu0 0
        %1435 = vmatpush1.bf16.msra.mxu0 0
        %1436 = vmatprep.subr.bf16.mxu0 0
        %1437 = vmatpush1.bf16.msra.mxu0 0
        %1438 = vmatprep.subr.bf16.mxu0 0
        %1439 = vmatpush1.bf16.msra.mxu0 0
        %1440 = vmatprep.subr.bf16.mxu0 0
        %1441 = vmatpush1.bf16.msra.mxu0 0
        %1442 = vmatprep.subr.bf16.mxu0 0
        %1443 = vmatpush1.bf16.msra.mxu0 0
        %1444 = vmatprep.subr.bf16.mxu0 0
        %1445 = vmatpush1.bf16.msra.mxu0 0
        %1446 = vmatprep.subr.bf16.mxu0 0
        %1447 = vmatpush1.bf16.msra.mxu0 0
        %1448 = vmatprep.subr.bf16.mxu0 0
        %1449 = vmatpush1.bf16.msra.mxu0 0
        %1450 = vmatprep.subr.bf16.mxu0 0
        %1451 = vmatpush1.bf16.msra.mxu0 0
        %1452 = vmatprep.mubr.bf16.mxu0 0
        %1453 = vmatmul.mubr.bf16.gmra.mrb[0].mxu0 %v1415
        %v1454 = vpop.f32.mrb[0].mxu0
        %v1455 = vadd.f32 0.0, %v1454
        %v1456 = vpop.f32.mrb[0].mxu0
        %v1457 = vpop.f32.mrb[0].mxu0
        %v1458 = vpop.f32.mrb[0].mxu0
        %1459 = vdwg.mxu0
        %1460 = vrot.lane.b32.xlu0 %v1069, 48
        %v1461 = vpop.permute.xlu0 %1460
        %v1463 = vsel %vm790, %v1411, 0
        %v1466 = vsel %vm1196, %v1461, 0
        %1468 = vmatprep.subr.bf16.mxu0 0
        %1469 = vmatpush1.bf16.msra.mxu0 %v1466
        %1470 = vmatprep.subr.bf16.mxu0 0
        %1471 = vmatpush1.bf16.msra.mxu0 0
        %1472 = vmatprep.subr.bf16.mxu0 0
        %1473 = vmatpush1.bf16.msra.mxu0 0
        %1474 = vmatprep.subr.bf16.mxu0 0
        %1475 = vmatpush1.bf16.msra.mxu0 0
        %1476 = vmatprep.subr.bf16.mxu0 0
        %1477 = vmatpush1.bf16.msra.mxu0 0
        %1478 = vmatprep.subr.bf16.mxu0 0
        %1479 = vmatpush1.bf16.msra.mxu0 0
        %1480 = vmatprep.subr.bf16.mxu0 0
        %1481 = vmatpush1.bf16.msra.mxu0 0
        %1482 = vmatprep.subr.bf16.mxu0 0
        %1483 = vmatpush1.bf16.msra.mxu0 0
        %1484 = vmatprep.subr.bf16.mxu0 0
        %1485 = vmatpush1.bf16.msra.mxu0 0
        %1486 = vmatprep.subr.bf16.mxu0 0
        %1487 = vmatpush1.bf16.msra.mxu0 0
        %1488 = vmatprep.subr.bf16.mxu0 0
        %1489 = vmatpush1.bf16.msra.mxu0 0
        %1490 = vmatprep.subr.bf16.mxu0 0
        %1491 = vmatpush1.bf16.msra.mxu0 0
        %1492 = vmatprep.subr.bf16.mxu0 0
        %1493 = vmatpush1.bf16.msra.mxu0 0
        %1494 = vmatprep.subr.bf16.mxu0 0
        %1495 = vmatpush1.bf16.msra.mxu0 0
        %1496 = vmatprep.subr.bf16.mxu0 0
        %1497 = vmatpush1.bf16.msra.mxu0 0
        %1498 = vmatprep.subr.bf16.mxu0 0
        %1499 = vmatpush1.bf16.msra.mxu0 0
        %1500 = vmatprep.mubr.bf16.mxu0 0
        %1501 = vmatmul.mubr.bf16.gmra.mrb[0].mxu0 %v1463
        %v1502 = vpop.f32.mrb[0].mxu0
        %v1503 = vadd.f32 0.0, %v1502
        %v1504 = vpop.f32.mrb[0].mxu0
        %v1505 = vpop.f32.mrb[0].mxu0
        %v1506 = vpop.f32.mrb[0].mxu0
        %1507 = vdwg.mxu0
        %1510 = vrot.lane.b32.xlu0 %v1455, 16
        %v1511 = vpop.permute.xlu0 %1510
        %1512 = vrot.lane.b32.xlu0 %v1503, 16
        %v1513 = vpop.permute.xlu0 %1512
        %v1516 = vsel %vm1072, %v1235, %v1511
        %v1517 = vsel %vm1072, %v1283, %v1513
        %v1518 = vpack.c.bf16 %v1517, %v1516
        %v1519 = vld [vmem:[%s744] sm:$0xf]
        %v1520 = vld [vmem:[%s744 + $0x4] sm:$0xf]
        %v1521 = vld [vmem:[%s744 + $0x8] sm:$0xf]
        %v1522 = vld [vmem:[%s744 + $0xc] sm:$0xf]
        %v1523 = vld [vmem:[%s747] sm:$0x1]
        %v1525 = vlaneseq
        %v1526 = vshrl.u32 %v1525, 7
        %v1527 = vsub.s32 0, %v1526
        %v1528 = vrot.slane %v1523, %v1527
        %v1534 = vunpack.c.l.b16 %v1519
        %v1535 = vunpack.c.l.b16 %v1520
        %v1536 = vunpack.c.l.b16 %v1521
        %v1537 = vunpack.c.l.b16 %v1522
        %v1538 = vpack.c.b16 %v1535, %v1534
        %v1539 = vpack.c.b16 %v1537, %v1536
        %v1543 = vsel %vm949, %v1518, 0
        %1545 = vmatprep.subr.bf16.mxu0 0
        %1546 = vmatpush1.bf16.msra.mxu0 %v1538
        %1547 = vmatprep.subr.bf16.mxu0 0
        %1548 = vmatpush1.bf16.msra.mxu0 %v1539
        %1549 = vmatprep.subr.bf16.mxu0 0
        %1550 = vmatpush1.bf16.msra.mxu0 0
        %1551 = vmatprep.subr.bf16.mxu0 0
        %1552 = vmatpush1.bf16.msra.mxu0 0
        %1553 = vmatprep.subr.bf16.mxu0 0
        %1554 = vmatpush1.bf16.msra.mxu0 0
        %1555 = vmatprep.subr.bf16.mxu0 0
        %1556 = vmatpush1.bf16.msra.mxu0 0
        %1557 = vmatprep.subr.bf16.mxu0 0
        %1558 = vmatpush1.bf16.msra.mxu0 0
        %1559 = vmatprep.subr.bf16.mxu0 0
        %1560 = vmatpush1.bf16.msra.mxu0 0
        %1561 = vmatprep.subr.bf16.mxu0 0
        %1562 = vmatpush1.bf16.msra.mxu0 0
        %1563 = vmatprep.subr.bf16.mxu0 0
        %1564 = vmatpush1.bf16.msra.mxu0 0
        %1565 = vmatprep.subr.bf16.mxu0 0
        %1566 = vmatpush1.bf16.msra.mxu0 0
        %1567 = vmatprep.subr.bf16.mxu0 0
        %1568 = vmatpush1.bf16.msra.mxu0 0
        %1569 = vmatprep.subr.bf16.mxu0 0
        %1570 = vmatpush1.bf16.msra.mxu0 0
        %1571 = vmatprep.subr.bf16.mxu0 0
        %1572 = vmatpush1.bf16.msra.mxu0 0
        %1573 = vmatprep.subr.bf16.mxu0 0
        %1574 = vmatpush1.bf16.msra.mxu0 0
        %1575 = vmatprep.subr.bf16.mxu0 0
        %1576 = vmatpush1.bf16.msra.mxu0 0
        %1577 = vmatprep.mubr.bf16.mxu0 0
        %1578 = vmatmul.mubr.bf16.gmra.mrb[0].mxu0 %v1543
        %v1579 = vpop.f32.mrb[0].mxu0
        %v1580 = vadd.f32 %v1528, %v1579
        %v1581 = vpop.f32.mrb[0].mxu0
        %v1582 = vpop.f32.mrb[0].mxu0
        %v1583 = vadd.f32 %v1528, %v1582
        %v1584 = vpop.f32.mrb[0].mxu0
        %1585 = vdwg.mxu0
        %v1586 = vadd.f32 %v1580, %v786
        %v1587 = vadd.f32 %v1583, %v787
        %v1588 = vsel %vm949, %v1586, 0.0
        %1589 = vadd.xlane.f32.xlu0 %v1588
        %v1590 = vpop.xlane.xlu0 %1589
        %v1591 = vsel %vm949, %v1587, 0.0
        %1592 = vadd.xlane.f32.xlu0 %v1591
        %v1593 = vpop.xlane.xlu0 %1592
        %v1594 = vmul.f32 %v1590, %v956
        %v1595 = vmul.f32 %v1593, %v956
        %v1596 = vsub.f32 %v1586, %v1594
        %v1597 = vsub.f32 %v1587, %v1595
        %v1598 = vmul.f32 %v1596, %v1596
        %v1599 = vmul.f32 %v1597, %v1597
        %v1600 = vsel %vm949, %v1598, 0.0
        %1601 = vadd.xlane.f32.xlu0 %v1600
        %v1602 = vpop.xlane.xlu0 %1601
        %v1603 = vsel %vm949, %v1599, 0.0
        %1604 = vadd.xlane.f32.xlu0 %v1603
        %v1605 = vpop.xlane.xlu0 %1604
        %v1606 = vmul.f32 %v1602, %v956
        %v1607 = vmul.f32 %v1605, %v956
        %v1608 = vadd.f32 %v1606, 1e-12
        %v1609 = vadd.f32 %v1607, 1e-12
        %v1610 = vrsqrt.pop %v1608
        %v1611 = vrsqrt.pop %v1609
        %v1612 = vmul.f32 %v1596, %v1610
        %v1613 = vmul.f32 %v1597, %v1611
        %v1614 = vld [vmem:[%s750] sm:$0x1]
        %v1616 = vlaneseq
        %v1617 = vshrl.u32 %v1616, 7
        %v1618 = vsub.s32 0, %v1617
        %v1619 = vrot.slane %v1614, %v1618
        %v1621 = vmul.f32 %v1612, %v1619
        %v1622 = vmul.f32 %v1613, %v1619
        %v1623 = vld [vmem:[%s753] sm:$0x1]
        %v1625 = vlaneseq
        %v1626 = vshrl.u32 %v1625, 7
        %v1627 = vsub.s32 0, %v1626
        %v1628 = vrot.slane %v1623, %v1627
        %v1630 = vadd.f32 %v1621, %v1628
        %v1631 = vadd.f32 %v1622, %v1628
        %v1632 = vmul.f32 %v993, 0.7
        %v1633 = vmul.f32 %v994, 0.7
        %v1634 = vmul.f32 %v1630, 0.3
        %v1635 = vmul.f32 %v1631, 0.3
        %v1636 = vadd.f32 %v1632, %v1634
        %v1637 = vadd.f32 %v1633, %v1635
        %v1638 = vpack.c.bf16 %v1637, %v1636
        %v1639 = vld [vmem:[%s758] sm:$0xf]
        %v1640 = vld [vmem:[%s758 + $0x4] sm:$0xf]
        %v1641 = vld [vmem:[%s758 + $0x8] sm:$0xf]
        %v1642 = vld [vmem:[%s758 + $0xc] sm:$0xf]
        %v1643 = vld [vmem:[%s761] sm:$0x1]
        %v1645 = vlaneseq
        %v1646 = vshrl.u32 %v1645, 7
        %v1647 = vsub.s32 0, %v1646
        %v1648 = vrot.slane %v1643, %v1647
        %v1654 = vunpack.c.l.b16 %v1639
        %v1655 = vunpack.c.l.b16 %v1640
        %v1656 = vunpack.c.l.b16 %v1641
        %v1657 = vunpack.c.l.b16 %v1642
        %v1658 = vpack.c.b16 %v1655, %v1654
        %v1659 = vpack.c.b16 %v1657, %v1656
        %v1663 = vsel %vm949, %v1638, 0
        %1665 = vmatprep.subr.bf16.mxu0 0
        %1666 = vmatpush1.bf16.msra.mxu0 %v1658
        %1667 = vmatprep.subr.bf16.mxu0 0
        %1668 = vmatpush1.bf16.msra.mxu0 %v1659
        %1669 = vmatprep.subr.bf16.mxu0 0
        %1670 = vmatpush1.bf16.msra.mxu0 0
        %1671 = vmatprep.subr.bf16.mxu0 0
        %1672 = vmatpush1.bf16.msra.mxu0 0
        %1673 = vmatprep.subr.bf16.mxu0 0
        %1674 = vmatpush1.bf16.msra.mxu0 0
        %1675 = vmatprep.subr.bf16.mxu0 0
        %1676 = vmatpush1.bf16.msra.mxu0 0
        %1677 = vmatprep.subr.bf16.mxu0 0
        %1678 = vmatpush1.bf16.msra.mxu0 0
        %1679 = vmatprep.subr.bf16.mxu0 0
        %1680 = vmatpush1.bf16.msra.mxu0 0
        %1681 = vmatprep.subr.bf16.mxu0 0
        %1682 = vmatpush1.bf16.msra.mxu0 0
        %1683 = vmatprep.subr.bf16.mxu0 0
        %1684 = vmatpush1.bf16.msra.mxu0 0
        %1685 = vmatprep.subr.bf16.mxu0 0
        %1686 = vmatpush1.bf16.msra.mxu0 0
        %1687 = vmatprep.subr.bf16.mxu0 0
        %1688 = vmatpush1.bf16.msra.mxu0 0
        %1689 = vmatprep.subr.bf16.mxu0 0
        %1690 = vmatpush1.bf16.msra.mxu0 0
        %1691 = vmatprep.subr.bf16.mxu0 0
        %1692 = vmatpush1.bf16.msra.mxu0 0
        %1693 = vmatprep.subr.bf16.mxu0 0
        %1694 = vmatpush1.bf16.msra.mxu0 0
        %1695 = vmatprep.subr.bf16.mxu0 0
        %1696 = vmatpush1.bf16.msra.mxu0 0
        %1697 = vmatprep.mubr.bf16.mxu0 0
        %1698 = vmatmul.mubr.bf16.gmra.mrb[0].mxu0 %v1663
        %v1699 = vpop.f32.mrb[0].mxu0
        %v1700 = vadd.f32 %v1648, %v1699
        %v1701 = vpop.f32.mrb[0].mxu0
        %v1702 = vpop.f32.mrb[0].mxu0
        %v1703 = vadd.f32 %v1648, %v1702
        %v1704 = vpop.f32.mrb[0].mxu0
        %1705 = vdwg.mxu0
        %v1706 = vmul.f32 %v1700, 0.5
        %v1707 = vmul.f32 %v1703, 0.5
        %v1708 = vmul.f32 %v1700, 0.70710677
        %v1709 = vmul.f32 %v1703, 0.70710677
        %v1710 = verf.f32.pop %v1708
        %v1711 = verf.f32.pop %v1709
        %v1712 = vadd.f32 %v1710, 1.0
        %v1713 = vadd.f32 %v1711, 1.0
        %v1714 = vmul.f32 %v1706, %v1712
        %v1715 = vmul.f32 %v1707, %v1713
        %v1716 = vpack.c.bf16 %v1715, %v1714
        %v1717 = vld [vmem:[%s766] sm:$0xf]
        %v1718 = vld [vmem:[%s766 + $0x4] sm:$0xf]
        %v1719 = vld [vmem:[%s766 + $0x8] sm:$0xf]
        %v1720 = vld [vmem:[%s766 + $0xc] sm:$0xf]
        %v1721 = vld [vmem:[%s766 + $0x10] sm:$0xf]
        %v1722 = vld [vmem:[%s766 + $0x14] sm:$0xf]
        %v1723 = vld [vmem:[%s766 + $0x18] sm:$0xf]
        %v1724 = vld [vmem:[%s766 + $0x1c] sm:$0xf]
        %v1725 = vld [vmem:[%s766 + $0x20] sm:$0xf]
        %v1726 = vld [vmem:[%s766 + $0x24] sm:$0xf]
        %v1727 = vld [vmem:[%s766 + $0x28] sm:$0xf]
        %v1728 = vld [vmem:[%s766 + $0x2c] sm:$0xf]
        %v1729 = vld [vmem:[%s766 + $0x30] sm:$0xf]
        %v1730 = vld [vmem:[%s766 + $0x34] sm:$0xf]
        %v1731 = vld [vmem:[%s766 + $0x38] sm:$0xf]
        %v1732 = vld [vmem:[%s766 + $0x3c] sm:$0xf]
        %v1733 = vld [vmem:[%s769] sm:$0x1]
        %v1735 = vlaneseq
        %v1736 = vshrl.u32 %v1735, 7
        %v1737 = vsub.s32 0, %v1736
        %v1738 = vrot.slane %v1733, %v1737
        %v1756 = vunpack.c.l.b16 %v1717
        %v1757 = vunpack.c.l.b16 %v1718
        %v1758 = vunpack.c.l.b16 %v1719
        %v1759 = vunpack.c.l.b16 %v1720
        %v1760 = vunpack.c.l.b16 %v1721
        %v1761 = vunpack.c.l.b16 %v1722
        %v1762 = vunpack.c.l.b16 %v1723
        %v1763 = vunpack.c.l.b16 %v1724
        %v1764 = vunpack.c.l.b16 %v1725
        %v1765 = vunpack.c.l.b16 %v1726
        %v1766 = vunpack.c.l.b16 %v1727
        %v1767 = vunpack.c.l.b16 %v1728
        %v1768 = vunpack.c.l.b16 %v1729
        %v1769 = vunpack.c.l.b16 %v1730
        %v1770 = vunpack.c.l.b16 %v1731
        %v1771 = vunpack.c.l.b16 %v1732
        %v1772 = vpack.c.b16 %v1757, %v1756
        %v1773 = vpack.c.b16 %v1759, %v1758
        %v1774 = vpack.c.b16 %v1761, %v1760
        %v1775 = vpack.c.b16 %v1763, %v1762
        %v1776 = vpack.c.b16 %v1765, %v1764
        %v1777 = vpack.c.b16 %v1767, %v1766
        %v1778 = vpack.c.b16 %v1769, %v1768
        %v1779 = vpack.c.b16 %v1771, %v1770
        %1788 = vmatprep.subr.bf16.mxu0 0
        %1789 = vmatpush1.bf16.msra.mxu0 %v1772
        %1790 = vmatprep.subr.bf16.mxu0 0
        %1791 = vmatpush1.bf16.msra.mxu0 %v1773
        %1792 = vmatprep.subr.bf16.mxu0 0
        %1793 = vmatpush1.bf16.msra.mxu0 %v1774
        %1794 = vmatprep.subr.bf16.mxu0 0
        %1795 = vmatpush1.bf16.msra.mxu0 %v1775
        %1796 = vmatprep.subr.bf16.mxu0 0
        %1797 = vmatpush1.bf16.msra.mxu0 %v1776
        %1798 = vmatprep.subr.bf16.mxu0 0
        %1799 = vmatpush1.bf16.msra.mxu0 %v1777
        %1800 = vmatprep.subr.bf16.mxu0 0
        %1801 = vmatpush1.bf16.msra.mxu0 %v1778
        %1802 = vmatprep.subr.bf16.mxu0 0
        %1803 = vmatpush1.bf16.msra.mxu0 %v1779
        %1804 = vmatprep.subr.bf16.mxu0 0
        %1805 = vmatpush1.bf16.msra.mxu0 0
        %1806 = vmatprep.subr.bf16.mxu0 0
        %1807 = vmatpush1.bf16.msra.mxu0 0
        %1808 = vmatprep.subr.bf16.mxu0 0
        %1809 = vmatpush1.bf16.msra.mxu0 0
        %1810 = vmatprep.subr.bf16.mxu0 0
        %1811 = vmatpush1.bf16.msra.mxu0 0
        %1812 = vmatprep.subr.bf16.mxu0 0
        %1813 = vmatpush1.bf16.msra.mxu0 0
        %1814 = vmatprep.subr.bf16.mxu0 0
        %1815 = vmatpush1.bf16.msra.mxu0 0
        %1816 = vmatprep.subr.bf16.mxu0 0
        %1817 = vmatpush1.bf16.msra.mxu0 0
        %1818 = vmatprep.subr.bf16.mxu0 0
        %1819 = vmatpush1.bf16.msra.mxu0 0
        %1820 = vmatprep.mubr.bf16.mxu0 0
        %1821 = vmatmul.mubr.bf16.gmra.mrb[0].mxu0 %v1716
        %v1822 = vpop.f32.mrb[0].mxu0
        %v1823 = vadd.f32 %v1738, %v1822
        %v1824 = vpop.f32.mrb[0].mxu0
        %v1825 = vpop.f32.mrb[0].mxu0
        %v1826 = vadd.f32 %v1738, %v1825
        %v1827 = vpop.f32.mrb[0].mxu0
        %1828 = vdwg.mxu0
        %v1829 = vadd.f32 %v1823, %v1636
        %v1830 = vadd.f32 %v1826, %v1637
        %v1831 = vsel %vm949, %v1829, 0.0
        %1832 = vadd.xlane.f32.xlu0 %v1831
        %v1833 = vpop.xlane.xlu0 %1832
        %v1834 = vsel %vm949, %v1830, 0.0
        %1835 = vadd.xlane.f32.xlu0 %v1834
        %v1836 = vpop.xlane.xlu0 %1835
        %v1837 = vmul.f32 %v1833, %v956
        %v1838 = vmul.f32 %v1836, %v956
        %v1839 = vsub.f32 %v1829, %v1837
        %v1840 = vsub.f32 %v1830, %v1838
        %v1841 = vmul.f32 %v1839, %v1839
        %v1842 = vmul.f32 %v1840, %v1840
        %v1843 = vsel %vm949, %v1841, 0.0
        %1844 = vadd.xlane.f32.xlu0 %v1843
        %v1845 = vpop.xlane.xlu0 %1844
        %v1846 = vsel %vm949, %v1842, 0.0
        %1847 = vadd.xlane.f32.xlu0 %v1846
        %v1848 = vpop.xlane.xlu0 %1847
        %v1849 = vmul.f32 %v1845, %v956
        %v1850 = vmul.f32 %v1848, %v956
        %v1851 = vadd.f32 %v1849, 1e-12
        %v1852 = vadd.f32 %v1850, 1e-12
        %v1853 = vrsqrt.pop %v1851
        %v1854 = vrsqrt.pop %v1852
        %v1855 = vmul.f32 %v1839, %v1853
        %v1856 = vmul.f32 %v1840, %v1854
        %v1857 = vld [vmem:[%s772] sm:$0x1]
        %v1859 = vlaneseq
        %v1860 = vshrl.u32 %v1859, 7
        %v1861 = vsub.s32 0, %v1860
        %v1862 = vrot.slane %v1857, %v1861
        %v1864 = vmul.f32 %v1855, %v1862
        %v1865 = vmul.f32 %v1856, %v1862
        %v1866 = vld [vmem:[%s775] sm:$0x1]
        %v1868 = vlaneseq
        %v1869 = vshrl.u32 %v1868, 7
        %v1870 = vsub.s32 0, %v1869
        %v1871 = vrot.slane %v1866, %v1870
        %v1873 = vadd.f32 %v1864, %v1871
        %v1874 = vadd.f32 %v1865, %v1871
        %1875 = vst.msk [vmem:[#allocation2] sm:$0xff] %vm949, %v1873
        %1876 = vst.msk [vmem:[#allocation2 + $0x8] sm:$0xff] %vm949, %v1874
        // Predicated region
        $region97: #{tpu_custom_call.1} parent=91 // pred_check
          %p1877 = pneg %p496
        $region98: #{tpu_custom_call.1} parent=91 // pred_check_branch
          %1879 = sbr.rel (%p1877) target = $region100
        $region99: #{tpu_custom_call.1} parent=91 // pred_region
          %s1881 = ssub.s32 256, 256
          %1882 = vsyncadd [#allocation3], %s1881
          %s1883 = sshll.u32 [#allocation2], 4
          %s1884 = int_to_ptr.vmem [resolvable:$true] %s1883
          %1889 = dma.vmem_to_hbm [thread:$0]  %s1884, 256, %s18, [#allocation3], 128, 128, 8
        $region100: #{tpu_custom_call.1} parent=91 // pred_fallthru
          _
        // Predicated region
        $region101: #{tpu_custom_call.1} parent=91 // pred_check
          %p1890 = pneg %p496
        $region102: #{tpu_custom_call.1} parent=91 // pred_check_branch
          %1892 = sbr.rel (%p1890) target = $region104
        $region103: #{tpu_custom_call.1} parent=91 // pred_region
          %1893 = dma.done [#allocation3], 256
        $region104: #{tpu_custom_call.1} parent=91 // pred_fallthru
          _
      $region92: #{tpu_custom_call.1} parent=5 // pred_fallthru
        _
      %p1894 = scmp.le.s32.totalorder 2, %s25
      // Predicated region
      $region105: #{tpu_custom_call.1} parent=5 // pred_check
        %p1895 = pneg %p1894
      $region106: #{tpu_custom_call.1} parent=5 // pred_check_branch
        %1897 = sbr.rel (%p1895) target = $region108
      $region107: #{tpu_custom_call.1} parent=5 // pred_region
        %s1898 = ssub.s32 %s25, 2
      $region108: #{tpu_custom_call.1} parent=5 // pred_fallthru
        _
    $region6: #{tpu_custom_call.1} parent=1 // loop_footer
      %s29 = sadd.s32 1, %s25
    $region7: #{tpu_custom_call.1} parent=1 // loop_footer_branch
      %24 = sbr.rel target = $region3
    $region8: #{tpu_custom_call.1} parent=1 // loop_exit
      _
    %1899 = vsyncpa [#allocation3], 1
    %s1900 = scalar_lea.sflag [#allocation3], 1
    %1901 = vsyncpa %s1900, 1

</llo_original>
